<compile_context>
chip_gen: v7x
topology: tpu7x:2x2x1
jax: 0.10.0
libtpu: 0.0.40
codegen_flags: <defaults>
</compile_context>

<pallas_src>
import functools

import jax
import jax.numpy as jnp
from jax.experimental import pallas as pl
from jax.experimental.pallas import tpu as pltpu


def _round_up(x, m):
    return (x + m - 1) // m * m


def _pick_tile(pref, dim):
    """Largest power-of-two multiple of 128 that is <= pref and <= padded dim."""
    cap = min(int(pref), _round_up(max(int(dim), 1), 128))
    t = 128
    while t * 2 <= cap:
        t *= 2
    return t


def _device_vmem_cap_bytes():
    """Per-generation scoped-VMEM cap (v7x: 64 MiB physical, v5e/v6e: 128 MiB)."""
    try:
        kind = jax.devices()[0].device_kind.lower()
    except Exception:  # pragma: no cover
        kind = ""
    if "v5" in kind or "v6" in kind:
        return 100 * 1024 * 1024
    return 56 * 1024 * 1024


def _vmem_limit_bytes(tm, tk, Kp, Dp, x_resident):
    adj = 2 * tm * tk * 1                               # int8 adjacency, double buffered
    x = 2 * (Kp if x_resident else tk) * Dp * 2         # bf16 x (resident or streamed)
    f_in = 2 * tm * Dp * 4                              # f32 prev accumulator
    y_out = 2 * tm * Dp * 2                             # bf16 y
    fo_out = 2 * tm * Dp * 4                            # f32 new accumulator
    invd = 2 * tm * 128 * 4                             # (tm,1) f32, lane-padded
    acc = tm * Dp * 4                                   # f32 scratch
    need = (adj + x + f_in + y_out + fo_out + invd + acc) * 3 // 2 + (4 << 20)
    return int(min(max(need, 32 << 20), _device_vmem_cap_bytes()))


# -----------------------------------------------------------------------------
# Pallas kernel: one propagation step
#   y = inv_deg * (C @ x) ;  f_new = f_prev + y / (num_layers + 1)
# -----------------------------------------------------------------------------
def _propagate_kernel(a_ref, x_ref, inv_ref, f_ref, y_ref, fo_ref, acc_ref,
                      *, inv_layers, tk, x_resident):
    """Grid = (row_tiles, k_tiles); k (reduction) is innermost / "arbitrary".

    a_ref  : (tm, tk)  int8 edge-count tile of the adjacency (streamed HBM)
    x_ref  : (Kp, Dp)  bf16 full resident source embeddings   (x_resident)
             (tk, Dp)  bf16 streamed source tile               (otherwise)
    inv_ref: (tm, 1)   f32  per-destination 1/deg
    f_ref  : (tm, Dp)  f32  previous running-average accumulator
    y_ref  : (tm, Dp)  bf16 output: new embeddings for this row tile
    fo_ref : (tm, Dp)  f32  output: updated running-average (aliased to f_ref's HBM)
    acc_ref: (tm, Dp)  f32  VMEM scratch accumulator (persists across k)
    """
    k = pl.program_id(1)

    @pl.when(k == 0)
    def _():
        acc_ref[...] = jnp.zeros_like(acc_ref)

    if x_resident:
        off = pl.multiple_of(k * tk, 128)
        x_blk = x_ref[pl.ds(off, tk), :]
    else:
        x_blk = x_ref[...]

    # int8 counts -> bf16 (0/1/2... exact), bf16 x bf16 -> f32 accumulate (MXU).
    acc_ref[...] += jnp.dot(
        a_ref[...].astype(jnp.bfloat16),
        x_blk,
        preferred_element_type=jnp.float32,
    )

    @pl.when(k == pl.num_programs(1) - 1)
    def _():
        y = acc_ref[...] * inv_ref[...]          # exact per-row mean (f32)
        y_ref[...] = y.astype(y_ref.dtype)       # bf16: only ever next layer's RHS
        fo_ref[...] = f_ref[...] + inv_layers * y


def _propagate_accumulate(adj_i8, inv_deg, x_src, f_prev, inv_layers, tm, tk,
                          x_resident_bytes):
    """y = inv_deg*(adj @ x_src) ; f_new = f_prev + inv_layers*y  (padded shapes)."""
    Mp, Kp = adj_i8.shape
    Dp = x_src.shape[1]
    grid = (Mp // tm, Kp // tk)

    # Keep x fully VMEM resident (DMA'd once per call) when it fits the budget.
    # (Accounts for the default double buffer; could be halved with
    #  pipeline_mode=pl.Buffered(1) if VMEM ever becomes the constraint.)
    x_resident = (2 * Kp * Dp * 2) <= x_resident_bytes
    if x_resident:
        x_spec = pl.BlockSpec((Kp, Dp), lambda i, k: (0, 0))
    else:
        x_spec = pl.BlockSpec((tk, Dp), lambda i, k: (k, 0))

    kernel = functools.partial(_propagate_kernel, inv_layers=float(inv_layers),
                               tk=tk, x_resident=x_resident)

    y, f_new = pl.pallas_call(
        kernel,
        out_shape=(
            jax.ShapeDtypeStruct((Mp, Dp), jnp.bfloat16),
            jax.ShapeDtypeStruct((Mp, Dp), jnp.float32),
        ),
        grid=grid,
        in_specs=[
            pl.BlockSpec((tm, tk), lambda i, k: (i, k)),   # int8 adjacency tile
            x_spec,                                        # bf16 source embeddings
            pl.BlockSpec((tm, 1), lambda i, k: (i, 0)),    # f32 per-row 1/deg
            pl.BlockSpec((tm, Dp), lambda i, k: (i, 0)),   # f32 prev accumulator
        ],
        out_specs=(
            pl.BlockSpec((tm, Dp), lambda i, k: (i, 0)),   # bf16 y
            pl.BlockSpec((tm, Dp), lambda i, k: (i, 0)),   # f32 f_new
        ),
        scratch_shapes=[pltpu.VMEM((tm, Dp), jnp.float32)],
        input_output_aliases={3: 1},                       # f_prev updated in place
        compiler_params=pltpu.CompilerParams(
            dimension_semantics=("parallel", "arbitrary"),
            vmem_limit_bytes=_vmem_limit_bytes(tm, tk, Kp, Dp, x_resident),
        ),
    )(adj_i8, x_src, inv_deg, f_prev)
    return y, f_new


# -----------------------------------------------------------------------------
# Full LightGCNStack forward
# -----------------------------------------------------------------------------
def lightgcn_stack_forward(counts_a2u, invdeg_u, counts_u2a, invdeg_a,
                           x_users, x_artists, num_layers, *,
                           tm=256, tk=1024, x_resident_bytes=24 << 20):
    """Matches LightGCNStack.forward(): K layers of alternating scatter-mean
    propagation with a 1/(K+1) running average of all layer outputs.

    counts_a2u : (U, A) int8 artist->user edge counts,  invdeg_u : (U, 1) f32
    counts_u2a : (A, U) int8 user->artist edge counts,  invdeg_a : (A, 1) f32
    x_users    : (U, D) f32   x_artists : (A, D) f32
    """
    assert num_layers >= 1, "Number of layers is not >=1"
    U, D = x_users.shape
    A = x_artists.shape[0]

    # Lane-dense feature dim; node dims padded to one quantum per axis so the
    # same padded arrays serve as both the row (tm) and reduction (tk) axis.
    Dp = _round_up(max(D, 128), 128)
    tm_u, tk_u = _pick_tile(tm, U), _pick_tile(tk, U)
    tm_a, tk_a = _pick_tile(tm, A), _pick_tile(tk, A)
    Up = _round_up(U, max(tm_u, tk_u))
    Ap = _round_up(A, max(tm_a, tk_a))

    a2u_p = jnp.pad(counts_a2u.astype(jnp.int8), ((0, Up - U), (0, Ap - A)))
    u2a_p = jnp.pad(counts_u2a.astype(jnp.int8), ((0, Ap - A), (0, Up - U)))
    invu_p = jnp.pad(invdeg_u.astype(jnp.float32), ((0, Up - U), (0, 0)))
    inva_p = jnp.pad(invdeg_a.astype(jnp.float32), ((0, Ap - A), (0, 0)))

    xu32 = jnp.pad(x_users.astype(jnp.float32), ((0, Up - U), (0, Dp - D)))
    xa32 = jnp.pad(x_artists.astype(jnp.float32), ((0, Ap - A), (0, Dp - D)))

    inv = 1.0 / (num_layers + 1)
    fu = xu32 * inv                    # layer-0 contribution, f32
    fa = xa32 * inv
    xu = xu32.astype(jnp.bfloat16)     # streamed RHS kept in bf16 in HBM
    xa = xa32.astype(jnp.bfloat16)

    for _ in range(num_layers):
        # Gauss-Seidel order must be preserved: artists use the *new* users.
        xu, fu = _propagate_accumulate(a2u_p, invu_p, xa, fu, inv,
                                       tm_u, tk_a, x_resident_bytes)
        xa, fa = _propagate_accumulate(u2a_p, inva_p, xu, fa, inv,
                                       tm_a, tk_u, x_resident_bytes)

    return fu[:U, :D], fa[:A, :D]


# -----------------------------------------------------------------------------
# Glue: dense edge-count matrix + per-destination 1/deg from an edge_index
# -----------------------------------------------------------------------------
def build_dense_adjacency(edge_index, num_src, num_dst):
    """edge_index: (2, E) int32, row0 = source nodes, row1 = target nodes.

    Returns (counts int8 (num_dst, num_src), inv_deg f32 (num_dst, 1)) such that
    inv_deg * (counts @ x_src) == scatter(..., reduce='mean') with zero rows for
    destinations without incoming edges.  Counts are small exact integers, so the
    int8 stream + f32 row scale is an exact factorization of the normalized
    adjacency (no quantization error).
    # TODO(synk): O(U*A) dense build; use a CSR + scalar-prefetch segment-sum
    # kernel for production-scale sparse graphs.
    """
    src, dst = edge_index[0], edge_index[1]
    counts = jnp.zeros((num_dst, num_src), jnp.float32).at[dst, src].add(1.0)
    deg = counts.sum(axis=1, keepdims=True)
    inv_deg = jnp.where(deg > 0, 1.0 / deg, 0.0)
    return counts.astype(jnp.int8), inv_deg


# -----------------------------------------------------------------------------
# Pure-JAX reference (segment mean), for correctness check
# -----------------------------------------------------------------------------
def reference_forward(edge_a2u, edge_u2a, x_users, x_artists, num_layers):
    U, A = x_users.shape[0], x_artists.shape[0]

    def scatter_mean(x_src, edge_index, num_dst):
        src, dst = edge_index[0], edge_index[1]
        summed = jnp.zeros((num_dst, x_src.shape[1]), x_src.dtype).at[dst].add(x_src[src])
        cnt = jnp.zeros((num_dst, 1), x_src.dtype).at[dst].add(1.0)
        return jnp.where(cnt > 0, summed / jnp.maximum(cnt, 1.0), 0.0)

    inv = 1.0 / (num_layers + 1)
    fu = x_users * inv
    fa = x_artists * inv
    xu, xa = x_users, x_artists
    for _ in range(num_layers):
        xu = scatter_mean(xa, edge_a2u, U)
        xa = scatter_mean(xu, edge_u2a, A)
        fu = fu + xu * inv
        fa = fa + xa * inv
    return fu, fa


if __name__ == "__main__":
    # Small synthetic "dataset".
    num_users = 384
    num_artists = 256
    latent_dim = 32
    num_layers = 2
    num_edges = 1500

    key = jax.random.PRNGKey(0)
    k_u, k_a, k_eu, k_ea = jax.random.split(key, 4)

    # Deterministic embedding tables (stand-in for nn.Embedding weights)
    x_users = jax.random.normal(k_u, (num_users, latent_dim), jnp.float32)
    x_artists = jax.random.normal(k_a, (num_artists, latent_dim), jnp.float32)

    # Random bipartite edges: artist -> user, and the flipped user -> artist
    e_users = jax.random.randint(k_eu, (num_edges,), 0, num_users, jnp.int32)
    e_artists = jax.random.randint(k_ea, (num_edges,), 0, num_artists, jnp.int32)
    edge_index_a2u = jnp.stack([e_artists, e_users])   # (2, E): src=artist, dst=user
    edge_index_u2a = jnp.stack([e_users, e_artists])   # (2, E): src=user,  dst=artist

    # Dense int8 counts + f32 inv_deg (glue, plain JAX)
    cnt_a2u, invdeg_u = build_dense_adjacency(edge_index_a2u, num_artists, num_users)
    cnt_u2a, invdeg_a = build_dense_adjacency(edge_index_u2a, num_users, num_artists)

    # Reference (exact f32 scatter-mean).
    fu_ref, fa_ref = reference_forward(edge_index_a2u, edge_index_u2a,
                                       x_users, x_artists, num_layers)

    # Three configurations to exercise every code path on this tiny graph:
    #   1) production-style big asymmetric tiles (clamped to the graph),
    #   2) small tiles -> multi-tile row AND reduction grid (resident x, sliced),
    #   3) small tiles with residency disabled -> streamed-x fallback path.
    configs = [
        dict(tm=256, tk=1024),
        dict(tm=128, tk=128),
        dict(tm=128, tk=128, x_resident_bytes=0),
    ]
    for cfg in configs:
        fu, fa = lightgcn_stack_forward(cnt_a2u, invdeg_u, cnt_u2a, invdeg_a,
                                        x_users, x_artists, num_layers, **cfg)
        jax.block_until_ready((fu, fa))
        # bf16 embedding stream -> relaxed tolerance; adjacency path is exact.
        assert jnp.allclose(fu, fu_ref, atol=3e-2, rtol=3e-2), (
            cfg, float(jnp.max(jnp.abs(fu - fu_ref))))
        assert jnp.allclose(fa, fa_ref, atol=3e-2, rtol=3e-2), (
            cfg, float(jnp.max(jnp.abs(fa - fa_ref))))

    print("KERNEL_OK")
</pallas_src>

<mosaic_0001>
module attributes {stable_mosaic.version = 11 : i64} {
  func.func @_propagate_kernel(%arg0: i32, %arg1: i32, %arg2: memref<256x256xi8, #tpu.memory_space<vmem>>, %arg3: memref<256x128xbf16, #tpu.memory_space<vmem>>, %arg4: memref<256x1xf32, #tpu.memory_space<vmem>>, %arg5: memref<256x128xf32, #tpu.memory_space<vmem>>, %arg6: memref<256x128xbf16, #tpu.memory_space<vmem>>, %arg7: memref<256x128xf32, #tpu.memory_space<vmem>>, %arg8: memref<256x128xf32, #tpu.memory_space<vmem>>) attributes {dimension_semantics = [#tpu.dimension_semantics<parallel>, #tpu.dimension_semantics<arbitrary>], iteration_bounds = array<i64: 2, 1>, scalar_prefetch = 0 : i64, scratch_operands = 1 : i64, tpu.core_type = #tpu.core_type<tc>, window_params = [{transform_indices = @transform_0, window_bounds = array<i64: 256, 256>}, {pipeline_mode = #tpu.pipeline_mode<synchronous>, transform_indices = @transform_1, window_bounds = array<i64: 256, 128>}, {transform_indices = @transform_2, window_bounds = array<i64: 256, 1>}, {transform_indices = @transform_3, window_bounds = array<i64: 256, 128>}, {transform_indices = @transform_4, window_bounds = array<i64: 256, 128>}, {transform_indices = @transform_5, window_bounds = array<i64: 256, 128>}]} {
    %c0_i32 = arith.constant 0 : i32
    %0 = arith.cmpi eq, %arg1, %c0_i32 : i32
    %1 = arith.extui %0 : i1 to i32
    %c0_i32_0 = arith.constant 0 : i32
    %2 = arith.cmpi ne, %1, %c0_i32_0 : i32
    scf.if %2 {
      %cst_9 = arith.constant 0.000000e+00 : f32
      %16 = vector.broadcast %cst_9 : f32 to vector<256x128xf32>
      %c0_10 = arith.constant 0 : index
      %c0_11 = arith.constant 0 : index
      %17 = vector.load %arg8[%c0_10, %c0_11] : memref<256x128xf32, #tpu.memory_space<vmem>>, vector<256x128xf32>
      tpu.vector_store %arg8[%c0_10, %c0_11], %16 {strides = array<i32>} : memref<256x128xf32, #tpu.memory_space<vmem>>, vector<256x128xf32>,
    } else {
    }
    %c256_i32 = arith.constant 256 : i32
    %3 = arith.muli %arg1, %c256_i32 : i32
    %4 = tpu.assume_multiple %3, 128 : i32
    %5 = arith.index_cast %4 : i32 to index
    %c0 = arith.constant 0 : index
    %6 = vector.load %arg3[%5, %c0] : memref<256x128xbf16, #tpu.memory_space<vmem>>, vector<256x128xbf16>
    %c0_1 = arith.constant 0 : index
    %c0_2 = arith.constant 0 : index
    %7 = vector.load %arg8[%c0_1, %c0_2] : memref<256x128xf32, #tpu.memory_space<vmem>>, vector<256x128xf32>
    %c0_3 = arith.constant 0 : index
    %c0_4 = arith.constant 0 : index
    %8 = vector.load %arg2[%c0_3, %c0_4] : memref<256x256xi8, #tpu.memory_space<vmem>>, vector<256x256xi8>
    %9 = arith.sitofp %8 : vector<256x256xi8> to vector<256x256xbf16>
    %cst = arith.constant dense<0.000000e+00> : vector<256x128xf32>
    %10 = tpu.matmul %9, %6, %cst {dimension_numbers = #tpu.dot_dimension_numbers<[1], [0], [0], [1], [0, 0, 1, 1], [], []>} : vector<256x256xbf16>, vector<256x128xbf16>, vector<256x128xf32> -> vector<256x128xf32>
    %11 = arith.addf %7, %10 : vector<256x128xf32>
    %c0_5 = arith.constant 0 : index
    %c0_6 = arith.constant 0 : index
    %12 = vector.load %arg8[%c0_5, %c0_6] : memref<256x128xf32, #tpu.memory_space<vmem>>, vector<256x128xf32>
    tpu.vector_store %arg8[%c0_5, %c0_6], %11 {strides = array<i32>} : memref<256x128xf32, #tpu.memory_space<vmem>>, vector<256x128xf32>,
    %c0_i32_7 = arith.constant 0 : i32
    %13 = arith.cmpi eq, %arg1, %c0_i32_7 : i32
    %14 = arith.extui %13 : i1 to i32
    %c0_i32_8 = arith.constant 0 : i32
    %15 = arith.cmpi ne, %14, %c0_i32_8 : i32
    scf.if %15 {
      %c0_9 = arith.constant 0 : index
      %c0_10 = arith.constant 0 : index
      %16 = vector.load %arg8[%c0_9, %c0_10] : memref<256x128xf32, #tpu.memory_space<vmem>>, vector<256x128xf32>
      %c0_11 = arith.constant 0 : index
      %c0_12 = arith.constant 0 : index
      %17 = vector.load %arg4[%c0_11, %c0_12] : memref<256x1xf32, #tpu.memory_space<vmem>>, vector<256x1xf32>
      %18 = vector.broadcast %17 : vector<256x1xf32> to vector<256x128xf32>
      %19 = arith.mulf %16, %18 : vector<256x128xf32>
      %20 = arith.truncf %19 : vector<256x128xf32> to vector<256x128xbf16>
      %c0_13 = arith.constant 0 : index
      %c0_14 = arith.constant 0 : index
      %21 = vector.load %arg6[%c0_13, %c0_14] : memref<256x128xbf16, #tpu.memory_space<vmem>>, vector<256x128xbf16>
      tpu.vector_store %arg6[%c0_13, %c0_14], %20 {strides = array<i32>} : memref<256x128xbf16, #tpu.memory_space<vmem>>, vector<256x128xbf16>,
      %c0_15 = arith.constant 0 : index
      %c0_16 = arith.constant 0 : index
      %22 = vector.load %arg5[%c0_15, %c0_16] : memref<256x128xf32, #tpu.memory_space<vmem>>, vector<256x128xf32>
      %cst_17 = arith.constant 0.333333343 : f32
      %23 = vector.broadcast %cst_17 : f32 to vector<256x128xf32>
      %24 = arith.mulf %23, %19 : vector<256x128xf32>
      %25 = arith.addf %22, %24 : vector<256x128xf32>
      %c0_18 = arith.constant 0 : index
      %c0_19 = arith.constant 0 : index
      %26 = vector.load %arg7[%c0_18, %c0_19] : memref<256x128xf32, #tpu.memory_space<vmem>>, vector<256x128xf32>
      tpu.vector_store %arg7[%c0_18, %c0_19], %25 {strides = array<i32>} : memref<256x128xf32, #tpu.memory_space<vmem>>, vector<256x128xf32>,
    } else {
    }
    return
  }
  func.func @transform_0(%arg0: i32, %arg1: i32) -> (i32, i32) {
    %c0_i32 = arith.constant 0 : i32
    return %arg0, %arg1 : i32, i32
  }
  func.func @transform_1(%arg0: i32, %arg1: i32) -> (i32, i32) {
    %c0_i32 = arith.constant 0 : i32
    %c0_i32_0 = arith.constant 0 : i32
    %c0_i32_1 = arith.constant 0 : i32
    return %c0_i32, %c0_i32_0 : i32, i32
  }
  func.func @transform_2(%arg0: i32, %arg1: i32) -> (i32, i32) {
    %c0_i32 = arith.constant 0 : i32
    %c0_i32_0 = arith.constant 0 : i32
    return %arg0, %c0_i32 : i32, i32
  }
  func.func @transform_3(%arg0: i32, %arg1: i32) -> (i32, i32) {
    %c0_i32 = arith.constant 0 : i32
    %c0_i32_0 = arith.constant 0 : i32
    return %arg0, %c0_i32 : i32, i32
  }
  func.func @transform_4(%arg0: i32, %arg1: i32) -> (i32, i32) {
    %c0_i32 = arith.constant 0 : i32
    %c0_i32_0 = arith.constant 0 : i32
    return %arg0, %c0_i32 : i32, i32
  }
  func.func @transform_5(%arg0: i32, %arg1: i32) -> (i32, i32) {
    %c0_i32 = arith.constant 0 : i32
    %c0_i32_0 = arith.constant 0 : i32
    return %arg0, %c0_i32 : i32, i32
  }
}

</mosaic_0001>

<llo_original>
// kernel: tpu_custom_call.1
$region0: #{tpu_custom_call.1}
  #allocation0 [shape = 'u32[]', space=smem, size = 0x4, offset = 0x4, fixed_abs, tag = 'smem constant byte address 0x4 - core index']
  #allocation1 [shape = 'u32[144,128]{1,0:T(1,128)}', space=vmem, size = 0x12000, scoped, tag = 'internal scratch']
  #allocation2 [shape = 'f32[256,128]{1,0:T(8,128)}', space=vmem, size = 0x20000, scoped, tag = 'scratch operand']
  %s0 = inlined_call_operand.vmem [shape: s8[512,256], index: 0, kind: input, shape index: {}]
  %s1 = inlined_call_operand.vmem [shape: bf16[256,128], index: 1, kind: input, shape index: {}]
  %s2 = inlined_call_operand.vmem [shape: f32[512,1], index: 2, kind: input, shape index: {}]
  %s3 = inlined_call_operand.hbm [shape: f32[512,128], index: 3, kind: input, shape index: {}, may-alias: {3,5}]
  %s4 = inlined_call_operand.hbm [shape: bf16[512,128], index: 4, kind: output, shape index: {0}]
  %s5 = inlined_call_operand.hbm [shape: f32[512,128], index: 5, kind: output, shape index: {1}, may-alias: {3,5}]
  %6 = xla_tuple %s4, %s5
  %s7 = sld [smem:[#allocation0]]
  $region69: #{tpu_custom_call.1} parent=0
    _
  %s9 = ssub.s32 1, %s7
  %s10 = scalar_select 0, %s9, %s7
  $region1: #{tpu_custom_call.1} parent=0
    #allocation3 [shape = 'u8[262144]{0}', space=vmem, size = 0x40000, scoped, tag = 'input window, operand 3']
    #allocation4 [shape = 's32[2]{0}', space=sflag, size = 0x8, scoped, tag = 'scoped memory for tpu_custom_call.1']
    #allocation5 [shape = 's32[2]{0}', space=sflag, size = 0x8, scoped, tag = 'scoped memory for tpu_custom_call.1']
    #allocation6 [shape = 'u8[131072]{0}', space=vmem, size = 0x20000, scoped, tag = 'output window, operand 0']
    #allocation7 [shape = 'u8[262144]{0}', space=vmem, size = 0x40000, scoped, tag = 'output window, operand 1']
    #allocation8 [shape = 's32[2]{0}', space=sflag, size = 0x8, scoped, tag = 'scoped memory for tpu_custom_call.1']
    %11 = vsyncpa [#allocation4], 0
    %s12 = scalar_lea.sflag [#allocation4], 1
    %13 = vsyncpa %s12, 0
    %14 = vsyncpa [#allocation5], 0
    %s15 = scalar_lea.sflag [#allocation5], 1
    %16 = vsyncpa %s15, 0
    %17 = vsyncpa [#allocation8], 0
    %s18 = scalar_lea.sflag [#allocation8], 1
    %19 = vsyncpa %s18, 0
    loop: start=0, step=1, limit=4
    $region2: #{tpu_custom_call.1} parent=1 // loop_pre_header
      _
    $region3: #{tpu_custom_call.1} parent=1 // loop_header
      %s21 = sphi 0, %s25
      %p22 = scmp.ge.s32.totalorder %s21, 4
      %s28 = sphi 0, %s40
      %s29 = sphi 0, %s36
      %s30 = sphi 0, %s28
      %s31 = sphi 0, %s29
      %s32 = sphi 0, %s30
      %s33 = sphi 0, %s31
      %s45 = sphi 0, %s47
      %s48 = sphi 0, %s45
      %s49 = sphi 0, %s48
      %s65 = sphi 0, %s49
      %s69 = sphi 0, %s69
      %s71 = sphi 0, %s69
      %s72 = sphi 0, %s71
      %s86 = sphi 0, %s72
      %s92 = sphi 0, %s94
      %s95 = sphi 0, %s92
      %s96 = sphi 0, %s95
      %s112 = sphi 0, %s96
      %s118 = sphi 0, %s120
      %s121 = sphi 0, %s118
      %s122 = sphi 0, %s121
      %s138 = sphi 0, %s122
      %s144 = sphi 0, %s146
      %s147 = sphi 0, %s144
      %s148 = sphi 0, %s147
      %s164 = sphi 0, %s148
      %s170 = sphi 0, %s172
      %s173 = sphi 0, %s170
      %s174 = sphi 0, %s173
      %s190 = sphi 0, %s174
    $region4: #{tpu_custom_call.1} parent=1 // loop_header_branch
      %24 = sbr.rel (%p22) target = $region8
    $region5: #{tpu_custom_call.1} parent=1 // loop_body
      %s26 = ssub.s32 %s21, 1
      %s27 = ssub.s32 %s21, 2
      %s34 = sadd.s32 1, %s29
      %p35 = scmp.ge.s32.totalorder %s34, 1
      %s36 = scalar_select %p35, 0, %s34
      %s37 = sadd.s32 1, %s28
      %s38 = scalar_select %p35, %s37, %s28
      %p39 = scmp.ge.s32.totalorder %s38, 2
      %s40 = scalar_select %p39, 0, %s38
      %s41 = ssub.s32 %s28, %s40
      %s42 = ssub.s32 %s29, %s36
      %s43 = sor.u32 %s41, %s42
      %p44 = scmp.eq.s32.totalorder %s43, 0
      %s46 = sadd.s32 %s45, 1
      %s47 = scalar_select %p44, %s45, %s46
      %p50 = pneg %p44
      %p51 = scmp.eq.s32.totalorder %s21, 1
      %p52 = por %p50, %p51
      %p53 = scmp.ne.s32.totalorder %s45, %s48
      %p54 = scmp.eq.s32.totalorder %s21, 0
      %p55 = por %p53, %p54
      %p56 = scmp.ne.s32.totalorder %s45, %s48
      %p57 = scmp.eq.s32.totalorder %s26, 1
      %p58 = por %p56, %p57
      %p59 = scmp.ne.s32.totalorder %s48, %s49
      %p60 = scmp.eq.s32.totalorder %s26, 0
      %p61 = por %p59, %p60
      %p62 = scmp.ne.s32.totalorder %s48, %s49
      %p63 = scmp.eq.s32.totalorder %s27, 1
      %p64 = por %p62, %p63
      %p66 = scmp.ne.s32.totalorder %s49, %s65
      %p67 = scmp.eq.s32.totalorder %s27, 0
      %p68 = por %p66, %p67
      %s70 = sadd.s32 %s69, 1
      %p73 = scmp.eq.s32.totalorder %s21, 1
      %p74 = scmp.ne.s32.totalorder %s69, %s71
      %p75 = scmp.eq.s32.totalorder %s21, 0
      %p76 = por %p74, %p75
      %p77 = scmp.ne.s32.totalorder %s69, %s71
      %p78 = scmp.eq.s32.totalorder %s26, 1
      %p79 = por %p77, %p78
      %p80 = scmp.ne.s32.totalorder %s71, %s72
      %p81 = scmp.eq.s32.totalorder %s26, 0
      %p82 = por %p80, %p81
      %p83 = scmp.ne.s32.totalorder %s71, %s72
      %p84 = scmp.eq.s32.totalorder %s27, 1
      %p85 = por %p83, %p84
      %p87 = scmp.ne.s32.totalorder %s72, %s86
      %p88 = scmp.eq.s32.totalorder %s27, 0
      %p89 = por %p87, %p88
      %s90 = ssub.s32 %s28, %s40
      %p91 = scmp.eq.s32.totalorder %s90, 0
      %s93 = sadd.s32 %s92, 1
      %s94 = scalar_select %p91, %s92, %s93
      %p97 = pneg %p91
      %p98 = scmp.eq.s32.totalorder %s21, 1
      %p99 = por %p97, %p98
      %p100 = scmp.ne.s32.totalorder %s92, %s95
      %p101 = scmp.eq.s32.totalorder %s21, 0
      %p102 = por %p100, %p101
      %p103 = scmp.ne.s32.totalorder %s92, %s95
      %p104 = scmp.eq.s32.totalorder %s26, 1
      %p105 = por %p103, %p104
      %p106 = scmp.ne.s32.totalorder %s95, %s96
      %p107 = scmp.eq.s32.totalorder %s26, 0
      %p108 = por %p106, %p107
      %p109 = scmp.ne.s32.totalorder %s95, %s96
      %p110 = scmp.eq.s32.totalorder %s27, 1
      %p111 = por %p109, %p110
      %p113 = scmp.ne.s32.totalorder %s96, %s112
      %p114 = scmp.eq.s32.totalorder %s27, 0
      %p115 = por %p113, %p114
      %s116 = ssub.s32 %s28, %s40
      %p117 = scmp.eq.s32.totalorder %s116, 0
      %s119 = sadd.s32 %s118, 1
      %s120 = scalar_select %p117, %s118, %s119
      %p123 = pneg %p117
      %p124 = scmp.eq.s32.totalorder %s21, 1
      %p125 = por %p123, %p124
      %p126 = scmp.ne.s32.totalorder %s118, %s121
      %p127 = scmp.eq.s32.totalorder %s21, 0
      %p128 = por %p126, %p127
      %p129 = scmp.ne.s32.totalorder %s118, %s121
      %p130 = scmp.eq.s32.totalorder %s26, 1
      %p131 = por %p129, %p130
      %p132 = scmp.ne.s32.totalorder %s121, %s122
      %p133 = scmp.eq.s32.totalorder %s26, 0
      %p134 = por %p132, %p133
      %p135 = scmp.ne.s32.totalorder %s121, %s122
      %p136 = scmp.eq.s32.totalorder %s27, 1
      %p137 = por %p135, %p136
      %p139 = scmp.ne.s32.totalorder %s122, %s138
      %p140 = scmp.eq.s32.totalorder %s27, 0
      %p141 = por %p139, %p140
      %s142 = ssub.s32 %s28, %s40
      %p143 = scmp.eq.s32.totalorder %s142, 0
      %s145 = sadd.s32 %s144, 1
      %s146 = scalar_select %p143, %s144, %s145
      %p149 = pneg %p143
      %p150 = scmp.eq.s32.totalorder %s21, 1
      %p151 = por %p149, %p150
      %p152 = scmp.ne.s32.totalorder %s144, %s147
      %p153 = scmp.eq.s32.totalorder %s21, 0
      %p154 = por %p152, %p153
      %p155 = scmp.ne.s32.totalorder %s144, %s147
      %p156 = scmp.eq.s32.totalorder %s26, 1
      %p157 = por %p155, %p156
      %p158 = scmp.ne.s32.totalorder %s147, %s148
      %p159 = scmp.eq.s32.totalorder %s26, 0
      %p160 = por %p158, %p159
      %p161 = scmp.ne.s32.totalorder %s147, %s148
      %p162 = scmp.eq.s32.totalorder %s27, 1
      %p163 = por %p161, %p162
      %p165 = scmp.ne.s32.totalorder %s148, %s164
      %p166 = scmp.eq.s32.totalorder %s27, 0
      %p167 = por %p165, %p166
      %s168 = ssub.s32 %s28, %s40
      %p169 = scmp.eq.s32.totalorder %s168, 0
      %s171 = sadd.s32 %s170, 1
      %s172 = scalar_select %p169, %s170, %s171
      %p175 = pneg %p169
      %p176 = scmp.eq.s32.totalorder %s21, 1
      %p177 = por %p175, %p176
      %p178 = scmp.ne.s32.totalorder %s170, %s173
      %p179 = scmp.eq.s32.totalorder %s21, 0
      %p180 = por %p178, %p179
      %p181 = scmp.ne.s32.totalorder %s170, %s173
      %p182 = scmp.eq.s32.totalorder %s26, 1
      %p183 = por %p181, %p182
      %p184 = scmp.ne.s32.totalorder %s173, %s174
      %p185 = scmp.eq.s32.totalorder %s26, 0
      %p186 = por %p184, %p185
      %p187 = scmp.ne.s32.totalorder %s173, %s174
      %p188 = scmp.eq.s32.totalorder %s27, 1
      %p189 = por %p187, %p188
      %p191 = scmp.ne.s32.totalorder %s174, %s190
      %p192 = scmp.eq.s32.totalorder %s27, 0
      %p193 = por %p191, %p192
      %p194 = scmp.le.s32.totalorder 1, %s21
      %p195 = scmp.lt.s32.totalorder %s21, 3
      %p196 = pnand %p194, %p195
      %p197 = pneg %p196
      // Predicated region
      $region9: #{tpu_custom_call.1} parent=5 // pred_check
        _
      $region10: #{tpu_custom_call.1} parent=5 // pred_check_branch
        %199 = sbr.rel (%p196) target = $region12
      $region11: #{tpu_custom_call.1} parent=5 // pred_region
        %s200 = ssub.s32 %s21, 1
        // Predicated region
        $region13: #{tpu_custom_call.1} parent=11 // pred_check
          %p201 = pneg %p82
        $region14: #{tpu_custom_call.1} parent=11 // pred_check_branch
          %203 = sbr.rel (%p201) target = $region16
        $region15: #{tpu_custom_call.1} parent=11 // pred_region
          _
        $region16: #{tpu_custom_call.1} parent=11 // pred_fallthru
          _
      $region12: #{tpu_custom_call.1} parent=5 // pred_fallthru
        _
      %p204 = scmp.lt.s32.totalorder %s21, 2
      // Predicated region
      $region17: #{tpu_custom_call.1} parent=5 // pred_check
        %p205 = pneg %p204
      $region18: #{tpu_custom_call.1} parent=5 // pred_check_branch
        %207 = sbr.rel (%p205) target = $region20
      $region19: #{tpu_custom_call.1} parent=5 // pred_region
        // Predicated region
        $region21: #{tpu_custom_call.1} parent=19 // pred_check
          %p208 = pneg %p55
        $region22: #{tpu_custom_call.1} parent=19 // pred_check_branch
          %210 = sbr.rel (%p208) target = $region24
        $region23: #{tpu_custom_call.1} parent=19 // pred_region
          %s211 = smul.u32 8, %s28
          %s212 = smul.u32 2, %s29
          %p213 = scmp.lt.s32.totalorder %s211, 15
          %s214 = scalar_select %p213, %s211, 15
          %p215 = scmp.lt.s32.totalorder %s212, 1
          %s216 = scalar_select %p215, %s212, 1
          %s217 = smul.addr %s214, 2
          %s218 = sadd.s32 %s216, %s217
          %s219 = smul.addr %s218, 8
          %s220 = scalar_lea.vmem %s0, %s219
          %s221 = smul.u32 8, %s28
          %s222 = smul.u32 2, %s29
        $region24: #{tpu_custom_call.1} parent=19 // pred_fallthru
          _
        // Predicated region
        $region25: #{tpu_custom_call.1} parent=19 // pred_check
          %p223 = pneg %p102
        $region26: #{tpu_custom_call.1} parent=19 // pred_check_branch
          %225 = sbr.rel (%p223) target = $region28
        $region27: #{tpu_custom_call.1} parent=19 // pred_region
          %s226 = smul.u32 32, %s28
          %p227 = scmp.lt.s32.totalorder %s226, 63
          %s228 = scalar_select %p227, %s226, 63
          %s229 = smul.addr %s228, 8
          %s230 = scalar_lea.vmem %s2, %s229
          %s231 = smul.u32 32, %s28
        $region28: #{tpu_custom_call.1} parent=19 // pred_fallthru
          _
        // Predicated region
        $region29: #{tpu_custom_call.1} parent=19 // pred_check
          %p232 = pneg %p128
        $region30: #{tpu_custom_call.1} parent=19 // pred_check_branch
          %234 = sbr.rel (%p232) target = $region32
        $region31: #{tpu_custom_call.1} parent=19 // pred_region
          %s235 = sand.u32 %s118, 1
          %s236 = scalar_lea.sflag [#allocation4], %s235
          %s237 = sand.u32 %s118, 1
          %s238 = smul.addr %s237, 256
          %s239 = scalar_lea.vmem [#allocation3], %s238
          %s240 = smul.u32 32, %s28
          %s242 = ssub.s32 4096, 4096
          %243 = vsyncadd %s236, %s242
          %s244 = smul.addr %s240, 128
          %s245 = scalar_lea.hbm %s3, %s244
          %s246 = sshll.u32 %s239, 4
          %s247 = int_to_ptr.vmem [resolvable:$true] %s246
          %252 = dma.hbm_to_vmem [thread:$0]  %s245, 4096, %s247, %s236, 128, 128, 8
        $region32: #{tpu_custom_call.1} parent=19 // pred_fallthru
          _
      $region20: #{tpu_custom_call.1} parent=5 // pred_fallthru
        _
      %p253 = scmp.le.s32.totalorder 1, %s21
      %p254 = scmp.lt.s32.totalorder %s21, 3
      %p255 = pnand %p253, %p254
      %p256 = pneg %p255
      // Predicated region
      $region33: #{tpu_custom_call.1} parent=5 // pred_check
        _
      $region34: #{tpu_custom_call.1} parent=5 // pred_check_branch
        %258 = sbr.rel (%p255) target = $region36
      $region35: #{tpu_custom_call.1} parent=5 // pred_region
        %s259 = ssub.s32 %s21, 1
        %s260 = sand.u32 %s121, 1
        %s261 = scalar_lea.sflag [#allocation4], %s260
        %s262 = sand.u32 %s121, 1
        %s263 = smul.addr %s262, 256
        %s264 = scalar_lea.vmem [#allocation3], %s263
        // Predicated region
        $region37: #{tpu_custom_call.1} parent=35 // pred_check
          %p265 = pneg %p134
        $region38: #{tpu_custom_call.1} parent=35 // pred_check_branch
          %267 = sbr.rel (%p265) target = $region40
        $region39: #{tpu_custom_call.1} parent=35 // pred_region
          %268 = dma.done %s261, 4096
        $region40: #{tpu_custom_call.1} parent=35 // pred_fallthru
          _
        %s269 = smul.u32 8, %s30
        %s270 = smul.u32 2, %s31
        %p271 = scmp.lt.s32.totalorder %s269, 15
        %s272 = scalar_select %p271, %s269, 15
        %p273 = scmp.lt.s32.totalorder %s270, 1
        %s274 = scalar_select %p273, %s270, 1
        %s275 = smul.addr %s272, 2
        %s276 = sadd.s32 %s274, %s275
        %s277 = smul.addr %s276, 8
        %s278 = scalar_lea.vmem %s0, %s277
        %p279 = pneg %p61
        %p280 = pneg %p58
        %p281 = pneg %p82
        %p282 = pneg %p79
        %s283 = smul.u32 32, %s30
        %p284 = scmp.lt.s32.totalorder %s283, 63
        %s285 = scalar_select %p284, %s283, 63
        %s286 = smul.addr %s285, 8
        %s287 = scalar_lea.vmem %s2, %s286
        %p288 = pneg %p108
        %p289 = pneg %p105
        %s290 = sand.u32 %s121, 1
        %s291 = scalar_lea.sflag [#allocation4], %s290
        %s292 = sand.u32 %s121, 1
        %s293 = smul.addr %s292, 256
        %s294 = scalar_lea.vmem [#allocation3], %s293
        %p295 = pneg %p134
        %p296 = pneg %p131
        %p297 = pneg %p160
        %p298 = pneg %p157
        %s299 = sand.u32 %s147, 1
        %s300 = scalar_lea.sflag [#allocation5], %s299
        %s301 = sand.u32 %s147, 1
        %s302 = smul.addr %s301, 128
        %s303 = scalar_lea.vmem [#allocation6], %s302
        %p304 = pneg %p186
        %p305 = pneg %p183
        %s306 = sand.u32 %s173, 1
        %s307 = scalar_lea.sflag [#allocation8], %s306
        %s308 = sand.u32 %s173, 1
        %s309 = smul.addr %s308, 256
        %s310 = scalar_lea.vmem [#allocation7], %s309
        %s311 = smul.u32 8, %s30
        %s312 = smul.u32 2, %s31
        %p313 = scmp.lt.s32.totalorder %s311, 15
        %s314 = scalar_select %p313, %s311, 15
        %p315 = scmp.lt.s32.totalorder %s312, 1
        %s316 = scalar_select %p315, %s312, 1
        %s317 = smul.addr %s314, 2
        %s318 = sadd.s32 %s316, %s317
        %s319 = smul.addr %s318, 8
        %s320 = scalar_lea.vmem %s0, %s319
        %s321 = smul.u32 8, %s30
        %s322 = smul.u32 2, %s31
        %s323 = smul.u32 32, %s30
        %p324 = scmp.lt.s32.totalorder %s323, 63
        %s325 = scalar_select %p324, %s323, 63
        %s326 = smul.addr %s325, 8
        %s327 = scalar_lea.vmem %s2, %s326
        %s328 = smul.u32 32, %s30
        %s329 = smul.u32 32, %s30
        %s330 = smul.u32 32, %s30
        %s331 = smul.u32 32, %s30
        %p333 = scmp.eq.s32.totalorder %s31, 0
        // Predicated region
        $region41: #{tpu_custom_call.1} parent=35 // pred_check
          %p334 = pneg %p333
        $region42: #{tpu_custom_call.1} parent=35 // pred_check_branch
          %336 = sbr.rel (%p334) target = $region44
        $region43: #{tpu_custom_call.1} parent=35 // pred_region
          %337 = vst [vmem:[#allocation2] sm:$0xff] 0.0
          %338 = vst [vmem:[#allocation2 + $0x8] sm:$0xff] 0.0
          %339 = vst [vmem:[#allocation2 + $0x10] sm:$0xff] 0.0
          %340 = vst [vmem:[#allocation2 + $0x18] sm:$0xff] 0.0
          %341 = vst [vmem:[#allocation2 + $0x20] sm:$0xff] 0.0
          %342 = vst [vmem:[#allocation2 + $0x28] sm:$0xff] 0.0
          %343 = vst [vmem:[#allocation2 + $0x30] sm:$0xff] 0.0
          %344 = vst [vmem:[#allocation2 + $0x38] sm:$0xff] 0.0
          %345 = vst [vmem:[#allocation2 + $0x40] sm:$0xff] 0.0
          %346 = vst [vmem:[#allocation2 + $0x48] sm:$0xff] 0.0
          %347 = vst [vmem:[#allocation2 + $0x50] sm:$0xff] 0.0
          %348 = vst [vmem:[#allocation2 + $0x58] sm:$0xff] 0.0
          %349 = vst [vmem:[#allocation2 + $0x60] sm:$0xff] 0.0
          %350 = vst [vmem:[#allocation2 + $0x68] sm:$0xff] 0.0
          %351 = vst [vmem:[#allocation2 + $0x70] sm:$0xff] 0.0
          %352 = vst [vmem:[#allocation2 + $0x78] sm:$0xff] 0.0
          %353 = vst [vmem:[#allocation2 + $0x80] sm:$0xff] 0.0
          %354 = vst [vmem:[#allocation2 + $0x88] sm:$0xff] 0.0
          %355 = vst [vmem:[#allocation2 + $0x90] sm:$0xff] 0.0
          %356 = vst [vmem:[#allocation2 + $0x98] sm:$0xff] 0.0
          %357 = vst [vmem:[#allocation2 + $0xa0] sm:$0xff] 0.0
          %358 = vst [vmem:[#allocation2 + $0xa8] sm:$0xff] 0.0
          %359 = vst [vmem:[#allocation2 + $0xb0] sm:$0xff] 0.0
          %360 = vst [vmem:[#allocation2 + $0xb8] sm:$0xff] 0.0
          %361 = vst [vmem:[#allocation2 + $0xc0] sm:$0xff] 0.0
          %362 = vst [vmem:[#allocation2 + $0xc8] sm:$0xff] 0.0
          %363 = vst [vmem:[#allocation2 + $0xd0] sm:$0xff] 0.0
          %364 = vst [vmem:[#allocation2 + $0xd8] sm:$0xff] 0.0
          %365 = vst [vmem:[#allocation2 + $0xe0] sm:$0xff] 0.0
          %366 = vst [vmem:[#allocation2 + $0xe8] sm:$0xff] 0.0
          %367 = vst [vmem:[#allocation2 + $0xf0] sm:$0xff] 0.0
          %368 = vst [vmem:[#allocation2 + $0xf8] sm:$0xff] 0.0
        $region44: #{tpu_custom_call.1} parent=35 // pred_fallthru
          _
        %s369 = smul.u32 %s31, 256
        %s370 = sshra.s32 %s369, 3
        %s371 = sand.u32 %s369, 7
        %s372 = smul.addr %s370, 4
        %s373 = scalar_lea.vmem %s1, %s372
        %v374 = vld [vmem:[%s373] sm:$0xf]
        %v375 = vld [vmem:[%s373 + $0x4] sm:$0xf]
        %v376 = vld [vmem:[%s373 + $0x8] sm:$0xf]
        %v377 = vld [vmem:[%s373 + $0xc] sm:$0xf]
        %v378 = vld [vmem:[%s373 + $0x10] sm:$0xf]
        %v379 = vld [vmem:[%s373 + $0x14] sm:$0xf]
        %v380 = vld [vmem:[%s373 + $0x18] sm:$0xf]
        %v381 = vld [vmem:[%s373 + $0x1c] sm:$0xf]
        %v382 = vld [vmem:[%s373 + $0x20] sm:$0xf]
        %v383 = vld [vmem:[%s373 + $0x24] sm:$0xf]
        %v384 = vld [vmem:[%s373 + $0x28] sm:$0xf]
        %v385 = vld [vmem:[%s373 + $0x2c] sm:$0xf]
        %v386 = vld [vmem:[%s373 + $0x30] sm:$0xf]
        %v387 = vld [vmem:[%s373 + $0x34] sm:$0xf]
        %v388 = vld [vmem:[%s373 + $0x38] sm:$0xf]
        %v389 = vld [vmem:[%s373 + $0x3c] sm:$0xf]
        %v390 = vld [vmem:[%s373 + $0x40] sm:$0xf]
        %v391 = vld [vmem:[%s373 + $0x44] sm:$0xf]
        %v392 = vld [vmem:[%s373 + $0x48] sm:$0xf]
        %v393 = vld [vmem:[%s373 + $0x4c] sm:$0xf]
        %v394 = vld [vmem:[%s373 + $0x50] sm:$0xf]
        %v395 = vld [vmem:[%s373 + $0x54] sm:$0xf]
        %v396 = vld [vmem:[%s373 + $0x58] sm:$0xf]
        %v397 = vld [vmem:[%s373 + $0x5c] sm:$0xf]
        %v398 = vld [vmem:[%s373 + $0x60] sm:$0xf]
        %v399 = vld [vmem:[%s373 + $0x64] sm:$0xf]
        %v400 = vld [vmem:[%s373 + $0x68] sm:$0xf]
        %v401 = vld [vmem:[%s373 + $0x6c] sm:$0xf]
        %v402 = vld [vmem:[%s373 + $0x70] sm:$0xf]
        %v403 = vld [vmem:[%s373 + $0x74] sm:$0xf]
        %v404 = vld [vmem:[%s373 + $0x78] sm:$0xf]
        %v405 = vld [vmem:[%s373 + $0x7c] sm:$0xf]
        %v406 = vld [vmem:[#allocation2] sm:$0xff]
        %v407 = vld [vmem:[#allocation2 + $0x8] sm:$0xff]
        %v408 = vld [vmem:[#allocation2 + $0x10] sm:$0xff]
        %v409 = vld [vmem:[#allocation2 + $0x18] sm:$0xff]
        %v410 = vld [vmem:[#allocation2 + $0x20] sm:$0xff]
        %v411 = vld [vmem:[#allocation2 + $0x28] sm:$0xff]
        %v412 = vld [vmem:[#allocation2 + $0x30] sm:$0xff]
        %v413 = vld [vmem:[#allocation2 + $0x38] sm:$0xff]
        %v414 = vld [vmem:[#allocation2 + $0x40] sm:$0xff]
        %v415 = vld [vmem:[#allocation2 + $0x48] sm:$0xff]
        %v416 = vld [vmem:[#allocation2 + $0x50] sm:$0xff]
        %v417 = vld [vmem:[#allocation2 + $0x58] sm:$0xff]
        %v418 = vld [vmem:[#allocation2 + $0x60] sm:$0xff]
        %v419 = vld [vmem:[#allocation2 + $0x68] sm:$0xff]
        %v420 = vld [vmem:[#allocation2 + $0x70] sm:$0xff]
        %v421 = vld [vmem:[#allocation2 + $0x78] sm:$0xff]
        %v422 = vld [vmem:[#allocation2 + $0x80] sm:$0xff]
        %v423 = vld [vmem:[#allocation2 + $0x88] sm:$0xff]
        %v424 = vld [vmem:[#allocation2 + $0x90] sm:$0xff]
        %v425 = vld [vmem:[#allocation2 + $0x98] sm:$0xff]
        %v426 = vld [vmem:[#allocation2 + $0xa0] sm:$0xff]
        %v427 = vld [vmem:[#allocation2 + $0xa8] sm:$0xff]
        %v428 = vld [vmem:[#allocation2 + $0xb0] sm:$0xff]
        %v429 = vld [vmem:[#allocation2 + $0xb8] sm:$0xff]
        %v430 = vld [vmem:[#allocation2 + $0xc0] sm:$0xff]
        %v431 = vld [vmem:[#allocation2 + $0xc8] sm:$0xff]
        %v432 = vld [vmem:[#allocation2 + $0xd0] sm:$0xff]
        %v433 = vld [vmem:[#allocation2 + $0xd8] sm:$0xff]
        %v434 = vld [vmem:[#allocation2 + $0xe0] sm:$0xff]
        %v435 = vld [vmem:[#allocation2 + $0xe8] sm:$0xff]
        %v436 = vld [vmem:[#allocation2 + $0xf0] sm:$0xff]
        %v437 = vld [vmem:[#allocation2 + $0xf8] sm:$0xff]
        %v438 = vld [vmem:[%s320] sm:$0xff]
        %v439 = vld [vmem:[%s320 + $0x8] sm:$0xff]
        %v440 = vld [vmem:[%s320 + $0x10] sm:$0xff]
        %v441 = vld [vmem:[%s320 + $0x18] sm:$0xff]
        %v442 = vld [vmem:[%s320 + $0x20] sm:$0xff]
        %v443 = vld [vmem:[%s320 + $0x28] sm:$0xff]
        %v444 = vld [vmem:[%s320 + $0x30] sm:$0xff]
        %v445 = vld [vmem:[%s320 + $0x38] sm:$0xff]
        %v446 = vld [vmem:[%s320 + $0x40] sm:$0xff]
        %v447 = vld [vmem:[%s320 + $0x48] sm:$0xff]
        %v448 = vld [vmem:[%s320 + $0x50] sm:$0xff]
        %v449 = vld [vmem:[%s320 + $0x58] sm:$0xff]
        %v450 = vld [vmem:[%s320 + $0x60] sm:$0xff]
        %v451 = vld [vmem:[%s320 + $0x68] sm:$0xff]
        %v452 = vld [vmem:[%s320 + $0x70] sm:$0xff]
        %v453 = vld [vmem:[%s320 + $0x78] sm:$0xff]
        %v454 = vunpack.c.l.s8.bf16 %v438
        %v455 = vunpack.c.l.s8.bf16 %v439
        %v456 = vunpack.c.h.s8.bf16 %v438
        %v457 = vunpack.c.h.s8.bf16 %v439
        %v458 = vunpack.c.l.s8.bf16 %v440
        %v459 = vunpack.c.l.s8.bf16 %v441
        %v460 = vunpack.c.h.s8.bf16 %v440
        %v461 = vunpack.c.h.s8.bf16 %v441
        %v462 = vunpack.c.l.s8.bf16 %v442
        %v463 = vunpack.c.l.s8.bf16 %v443
        %v464 = vunpack.c.h.s8.bf16 %v442
        %v465 = vunpack.c.h.s8.bf16 %v443
        %v466 = vunpack.c.l.s8.bf16 %v444
        %v467 = vunpack.c.l.s8.bf16 %v445
        %v468 = vunpack.c.h.s8.bf16 %v444
        %v469 = vunpack.c.h.s8.bf16 %v445
        %v470 = vunpack.c.l.s8.bf16 %v446
        %v471 = vunpack.c.l.s8.bf16 %v447
        %v472 = vunpack.c.h.s8.bf16 %v446
        %v473 = vunpack.c.h.s8.bf16 %v447
        %v474 = vunpack.c.l.s8.bf16 %v448
        %v475 = vunpack.c.l.s8.bf16 %v449
        %v476 = vunpack.c.h.s8.bf16 %v448
        %v477 = vunpack.c.h.s8.bf16 %v449
        %v478 = vunpack.c.l.s8.bf16 %v450
        %v479 = vunpack.c.l.s8.bf16 %v451
        %v480 = vunpack.c.h.s8.bf16 %v450
        %v481 = vunpack.c.h.s8.bf16 %v451
        %v482 = vunpack.c.l.s8.bf16 %v452
        %v483 = vunpack.c.l.s8.bf16 %v453
        %v484 = vunpack.c.h.s8.bf16 %v452
        %v485 = vunpack.c.h.s8.bf16 %v453
        %v518 = vunpack.c.l.b16 %v374
        %v519 = vunpack.c.l.b16 %v375
        %v520 = vunpack.c.l.b16 %v376
        %v521 = vunpack.c.l.b16 %v377
        %v522 = vunpack.c.l.b16 %v378
        %v523 = vunpack.c.l.b16 %v379
        %v524 = vunpack.c.l.b16 %v380
        %v525 = vunpack.c.l.b16 %v381
        %v526 = vunpack.c.l.b16 %v382
        %v527 = vunpack.c.l.b16 %v383
        %v528 = vunpack.c.l.b16 %v384
        %v529 = vunpack.c.l.b16 %v385
        %v530 = vunpack.c.l.b16 %v386
        %v531 = vunpack.c.l.b16 %v387
        %v532 = vunpack.c.l.b16 %v388
        %v533 = vunpack.c.l.b16 %v389
        %v534 = vunpack.c.l.b16 %v390
        %v535 = vunpack.c.l.b16 %v391
        %v536 = vunpack.c.l.b16 %v392
        %v537 = vunpack.c.l.b16 %v393
        %v538 = vunpack.c.l.b16 %v394
        %v539 = vunpack.c.l.b16 %v395
        %v540 = vunpack.c.l.b16 %v396
        %v541 = vunpack.c.l.b16 %v397
        %v542 = vunpack.c.l.b16 %v398
        %v543 = vunpack.c.l.b16 %v399
        %v544 = vunpack.c.l.b16 %v400
        %v545 = vunpack.c.l.b16 %v401
        %v546 = vunpack.c.l.b16 %v402
        %v547 = vunpack.c.l.b16 %v403
        %v548 = vunpack.c.l.b16 %v404
        %v549 = vunpack.c.l.b16 %v405
        %v550 = vpack.c.b16 %v519, %v518
        %v551 = vpack.c.b16 %v521, %v520
        %v552 = vpack.c.b16 %v523, %v522
        %v553 = vpack.c.b16 %v525, %v524
        %v554 = vpack.c.b16 %v527, %v526
        %v555 = vpack.c.b16 %v529, %v528
        %v556 = vpack.c.b16 %v531, %v530
        %v557 = vpack.c.b16 %v533, %v532
        %v558 = vpack.c.b16 %v535, %v534
        %v559 = vpack.c.b16 %v537, %v536
        %v560 = vpack.c.b16 %v539, %v538
        %v561 = vpack.c.b16 %v541, %v540
        %v562 = vpack.c.b16 %v543, %v542
        %v563 = vpack.c.b16 %v545, %v544
        %v564 = vpack.c.b16 %v547, %v546
        %v565 = vpack.c.b16 %v549, %v548
        %582 = vmatprep.subr.bf16.mxu0 0
        %583 = vmatpush1.bf16.msra.mxu0 %v550
        %584 = vmatprep.subr.bf16.mxu0 0
        %585 = vmatpush1.bf16.msra.mxu0 %v551
        %586 = vmatprep.subr.bf16.mxu0 0
        %587 = vmatpush1.bf16.msra.mxu0 %v552
        %588 = vmatprep.subr.bf16.mxu0 0
        %589 = vmatpush1.bf16.msra.mxu0 %v553
        %590 = vmatprep.subr.bf16.mxu0 0
        %591 = vmatpush1.bf16.msra.mxu0 %v554
        %592 = vmatprep.subr.bf16.mxu0 0
        %593 = vmatpush1.bf16.msra.mxu0 %v555
        %594 = vmatprep.subr.bf16.mxu0 0
        %595 = vmatpush1.bf16.msra.mxu0 %v556
        %596 = vmatprep.subr.bf16.mxu0 0
        %597 = vmatpush1.bf16.msra.mxu0 %v557
        %598 = vmatprep.subr.bf16.mxu0 0
        %599 = vmatpush1.bf16.msra.mxu0 %v558
        %600 = vmatprep.subr.bf16.mxu0 0
        %601 = vmatpush1.bf16.msra.mxu0 %v559
        %602 = vmatprep.subr.bf16.mxu0 0
        %603 = vmatpush1.bf16.msra.mxu0 %v560
        %604 = vmatprep.subr.bf16.mxu0 0
        %605 = vmatpush1.bf16.msra.mxu0 %v561
        %606 = vmatprep.subr.bf16.mxu0 0
        %607 = vmatpush1.bf16.msra.mxu0 %v562
        %608 = vmatprep.subr.bf16.mxu0 0
        %609 = vmatpush1.bf16.msra.mxu0 %v563
        %610 = vmatprep.subr.bf16.mxu0 0
        %611 = vmatpush1.bf16.msra.mxu0 %v564
        %612 = vmatprep.subr.bf16.mxu0 0
        %613 = vmatpush1.bf16.msra.mxu0 %v565
        %614 = vmatprep.mubr.bf16.mxu0 %v455
        %615 = vmatmul.mubr.bf16.gmra.mrb[0].mxu0 %v454
        %v616 = vpop.f32.mrb[0].mxu0
        %v617 = vadd.f32 0.0, %v616
        %v618 = vpop.f32.mrb[0].mxu0
        %v619 = vpop.f32.mrb[0].mxu0
        %v620 = vadd.f32 0.0, %v619
        %v621 = vpop.f32.mrb[0].mxu0
        %622 = vmatprep.mubr.bf16.mxu0 %v457
        %623 = vmatmul.mubr.bf16.gmra.mrb[0].mxu0 %v456
        %v624 = vpop.f32.mrb[0].mxu0
        %v625 = vadd.f32 0.0, %v624
        %v626 = vpop.f32.mrb[0].mxu0
        %v627 = vpop.f32.mrb[0].mxu0
        %v628 = vadd.f32 0.0, %v627
        %v629 = vpop.f32.mrb[0].mxu0
        %630 = vmatprep.mubr.bf16.mxu0 %v459
        %631 = vmatmul.mubr.bf16.gmra.mrb[0].mxu0 %v458
        %v632 = vpop.f32.mrb[0].mxu0
        %v633 = vadd.f32 0.0, %v632
        %v634 = vpop.f32.mrb[0].mxu0
        %v635 = vpop.f32.mrb[0].mxu0
        %v636 = vadd.f32 0.0, %v635
        %v637 = vpop.f32.mrb[0].mxu0
        %638 = vmatprep.mubr.bf16.mxu0 %v461
        %639 = vmatmul.mubr.bf16.gmra.mrb[0].mxu0 %v460
        %v640 = vpop.f32.mrb[0].mxu0
        %v641 = vadd.f32 0.0, %v640
        %v642 = vpop.f32.mrb[0].mxu0
        %v643 = vpop.f32.mrb[0].mxu0
        %v644 = vadd.f32 0.0, %v643
        %v645 = vpop.f32.mrb[0].mxu0
        %646 = vmatprep.mubr.bf16.mxu0 %v463
        %647 = vmatmul.mubr.bf16.gmra.mrb[0].mxu0 %v462
        %v648 = vpop.f32.mrb[0].mxu0
        %v649 = vadd.f32 0.0, %v648
        %v650 = vpop.f32.mrb[0].mxu0
        %v651 = vpop.f32.mrb[0].mxu0
        %v652 = vadd.f32 0.0, %v651
        %v653 = vpop.f32.mrb[0].mxu0
        %654 = vmatprep.mubr.bf16.mxu0 %v465
        %655 = vmatmul.mubr.bf16.gmra.mrb[0].mxu0 %v464
        %v656 = vpop.f32.mrb[0].mxu0
        %v657 = vadd.f32 0.0, %v656
        %v658 = vpop.f32.mrb[0].mxu0
        %v659 = vpop.f32.mrb[0].mxu0
        %v660 = vadd.f32 0.0, %v659
        %v661 = vpop.f32.mrb[0].mxu0
        %662 = vmatprep.mubr.bf16.mxu0 %v467
        %663 = vmatmul.mubr.bf16.gmra.mrb[0].mxu0 %v466
        %v664 = vpop.f32.mrb[0].mxu0
        %v665 = vadd.f32 0.0, %v664
        %v666 = vpop.f32.mrb[0].mxu0
        %v667 = vpop.f32.mrb[0].mxu0
        %v668 = vadd.f32 0.0, %v667
        %v669 = vpop.f32.mrb[0].mxu0
        %670 = vmatprep.mubr.bf16.mxu0 %v469
        %671 = vmatmul.mubr.bf16.gmra.mrb[0].mxu0 %v468
        %v672 = vpop.f32.mrb[0].mxu0
        %v673 = vadd.f32 0.0, %v672
        %v674 = vpop.f32.mrb[0].mxu0
        %v675 = vpop.f32.mrb[0].mxu0
        %v676 = vadd.f32 0.0, %v675
        %v677 = vpop.f32.mrb[0].mxu0
        %678 = vmatprep.mubr.bf16.mxu0 %v471
        %679 = vmatmul.mubr.bf16.gmra.mrb[0].mxu0 %v470
        %v680 = vpop.f32.mrb[0].mxu0
        %v681 = vadd.f32 0.0, %v680
        %v682 = vpop.f32.mrb[0].mxu0
        %v683 = vpop.f32.mrb[0].mxu0
        %v684 = vadd.f32 0.0, %v683
        %v685 = vpop.f32.mrb[0].mxu0
        %686 = vmatprep.mubr.bf16.mxu0 %v473
        %687 = vmatmul.mubr.bf16.gmra.mrb[0].mxu0 %v472
        %v688 = vpop.f32.mrb[0].mxu0
        %v689 = vadd.f32 0.0, %v688
        %v690 = vpop.f32.mrb[0].mxu0
        %v691 = vpop.f32.mrb[0].mxu0
        %v692 = vadd.f32 0.0, %v691
        %v693 = vpop.f32.mrb[0].mxu0
        %694 = vmatprep.mubr.bf16.mxu0 %v475
        %695 = vmatmul.mubr.bf16.gmra.mrb[0].mxu0 %v474
        %v696 = vpop.f32.mrb[0].mxu0
        %v697 = vadd.f32 0.0, %v696
        %v698 = vpop.f32.mrb[0].mxu0
        %v699 = vpop.f32.mrb[0].mxu0
        %v700 = vadd.f32 0.0, %v699
        %v701 = vpop.f32.mrb[0].mxu0
        %702 = vmatprep.mubr.bf16.mxu0 %v477
        %703 = vmatmul.mubr.bf16.gmra.mrb[0].mxu0 %v476
        %v704 = vpop.f32.mrb[0].mxu0
        %v705 = vadd.f32 0.0, %v704
        %v706 = vpop.f32.mrb[0].mxu0
        %v707 = vpop.f32.mrb[0].mxu0
        %v708 = vadd.f32 0.0, %v707
        %v709 = vpop.f32.mrb[0].mxu0
        %710 = vmatprep.mubr.bf16.mxu0 %v479
        %711 = vmatmul.mubr.bf16.gmra.mrb[0].mxu0 %v478
        %v712 = vpop.f32.mrb[0].mxu0
        %v713 = vadd.f32 0.0, %v712
        %v714 = vpop.f32.mrb[0].mxu0
        %v715 = vpop.f32.mrb[0].mxu0
        %v716 = vadd.f32 0.0, %v715
        %v717 = vpop.f32.mrb[0].mxu0
        %718 = vmatprep.mubr.bf16.mxu0 %v481
        %719 = vmatmul.mubr.bf16.gmra.mrb[0].mxu0 %v480
        %v720 = vpop.f32.mrb[0].mxu0
        %v721 = vadd.f32 0.0, %v720
        %v722 = vpop.f32.mrb[0].mxu0
        %v723 = vpop.f32.mrb[0].mxu0
        %v724 = vadd.f32 0.0, %v723
        %v725 = vpop.f32.mrb[0].mxu0
        %726 = vmatprep.mubr.bf16.mxu0 %v483
        %727 = vmatmul.mubr.bf16.gmra.mrb[0].mxu0 %v482
        %v728 = vpop.f32.mrb[0].mxu0
        %v729 = vadd.f32 0.0, %v728
        %v730 = vpop.f32.mrb[0].mxu0
        %v731 = vpop.f32.mrb[0].mxu0
        %v732 = vadd.f32 0.0, %v731
        %v733 = vpop.f32.mrb[0].mxu0
        %734 = vmatprep.mubr.bf16.mxu0 %v485
        %735 = vmatmul.mubr.bf16.gmra.mrb[0].mxu0 %v484
        %v736 = vpop.f32.mrb[0].mxu0
        %v737 = vadd.f32 0.0, %v736
        %v738 = vpop.f32.mrb[0].mxu0
        %v739 = vpop.f32.mrb[0].mxu0
        %v740 = vadd.f32 0.0, %v739
        %v741 = vpop.f32.mrb[0].mxu0
        %742 = vdwg.mxu0
        %v743 = vadd.f32 %v406, %v617
        %v744 = vadd.f32 %v407, %v620
        %v745 = vadd.f32 %v408, %v625
        %v746 = vadd.f32 %v409, %v628
        %v747 = vadd.f32 %v410, %v633
        %v748 = vadd.f32 %v411, %v636
        %v749 = vadd.f32 %v412, %v641
        %v750 = vadd.f32 %v413, %v644
        %v751 = vadd.f32 %v414, %v649
        %v752 = vadd.f32 %v415, %v652
        %v753 = vadd.f32 %v416, %v657
        %v754 = vadd.f32 %v417, %v660
        %v755 = vadd.f32 %v418, %v665
        %v756 = vadd.f32 %v419, %v668
        %v757 = vadd.f32 %v420, %v673
        %v758 = vadd.f32 %v421, %v676
        %v759 = vadd.f32 %v422, %v681
        %v760 = vadd.f32 %v423, %v684
        %v761 = vadd.f32 %v424, %v689
        %v762 = vadd.f32 %v425, %v692
        %v763 = vadd.f32 %v426, %v697
        %v764 = vadd.f32 %v427, %v700
        %v765 = vadd.f32 %v428, %v705
        %v766 = vadd.f32 %v429, %v708
        %v767 = vadd.f32 %v430, %v713
        %v768 = vadd.f32 %v431, %v716
        %v769 = vadd.f32 %v432, %v721
        %v770 = vadd.f32 %v433, %v724
        %v771 = vadd.f32 %v434, %v729
        %v772 = vadd.f32 %v435, %v732
        %v773 = vadd.f32 %v436, %v737
        %v774 = vadd.f32 %v437, %v740
        %775 = vst [vmem:[#allocation2] sm:$0xff] %v743
        %776 = vst [vmem:[#allocation2 + $0x8] sm:$0xff] %v744
        %777 = vst [vmem:[#allocation2 + $0x10] sm:$0xff] %v745
        %778 = vst [vmem:[#allocation2 + $0x18] sm:$0xff] %v746
        %779 = vst [vmem:[#allocation2 + $0x20] sm:$0xff] %v747
        %780 = vst [vmem:[#allocation2 + $0x28] sm:$0xff] %v748
        %781 = vst [vmem:[#allocation2 + $0x30] sm:$0xff] %v749
        %782 = vst [vmem:[#allocation2 + $0x38] sm:$0xff] %v750
        %783 = vst [vmem:[#allocation2 + $0x40] sm:$0xff] %v751
        %784 = vst [vmem:[#allocation2 + $0x48] sm:$0xff] %v752
        %785 = vst [vmem:[#allocation2 + $0x50] sm:$0xff] %v753
        %786 = vst [vmem:[#allocation2 + $0x58] sm:$0xff] %v754
        %787 = vst [vmem:[#allocation2 + $0x60] sm:$0xff] %v755
        %788 = vst [vmem:[#allocation2 + $0x68] sm:$0xff] %v756
        %789 = vst [vmem:[#allocation2 + $0x70] sm:$0xff] %v757
        %790 = vst [vmem:[#allocation2 + $0x78] sm:$0xff] %v758
        %791 = vst [vmem:[#allocation2 + $0x80] sm:$0xff] %v759
        %792 = vst [vmem:[#allocation2 + $0x88] sm:$0xff] %v760
        %793 = vst [vmem:[#allocation2 + $0x90] sm:$0xff] %v761
        %794 = vst [vmem:[#allocation2 + $0x98] sm:$0xff] %v762
        %795 = vst [vmem:[#allocation2 + $0xa0] sm:$0xff] %v763
        %796 = vst [vmem:[#allocation2 + $0xa8] sm:$0xff] %v764
        %797 = vst [vmem:[#allocation2 + $0xb0] sm:$0xff] %v765
        %798 = vst [vmem:[#allocation2 + $0xb8] sm:$0xff] %v766
        %799 = vst [vmem:[#allocation2 + $0xc0] sm:$0xff] %v767
        %800 = vst [vmem:[#allocation2 + $0xc8] sm:$0xff] %v768
        %801 = vst [vmem:[#allocation2 + $0xd0] sm:$0xff] %v769
        %802 = vst [vmem:[#allocation2 + $0xd8] sm:$0xff] %v770
        %803 = vst [vmem:[#allocation2 + $0xe0] sm:$0xff] %v771
        %804 = vst [vmem:[#allocation2 + $0xe8] sm:$0xff] %v772
        %805 = vst [vmem:[#allocation2 + $0xf0] sm:$0xff] %v773
        %806 = vst [vmem:[#allocation2 + $0xf8] sm:$0xff] %v774
        // Predicated region
        $region45: #{tpu_custom_call.1} parent=35 // pred_check
          %p807 = pneg %p333
        $region46: #{tpu_custom_call.1} parent=35 // pred_check_branch
          %809 = sbr.rel (%p807) target = $region48
        $region47: #{tpu_custom_call.1} parent=35 // pred_region
          %v810 = vld [vmem:[#allocation2] sm:$0xff]
          %v811 = vld [vmem:[#allocation2 + $0x8] sm:$0xff]
          %v812 = vld [vmem:[#allocation2 + $0x10] sm:$0xff]
          %v813 = vld [vmem:[#allocation2 + $0x18] sm:$0xff]
          %v814 = vld [vmem:[#allocation2 + $0x20] sm:$0xff]
          %v815 = vld [vmem:[#allocation2 + $0x28] sm:$0xff]
          %v816 = vld [vmem:[#allocation2 + $0x30] sm:$0xff]
          %v817 = vld [vmem:[#allocation2 + $0x38] sm:$0xff]
          %v818 = vld [vmem:[#allocation2 + $0x40] sm:$0xff]
          %v819 = vld [vmem:[#allocation2 + $0x48] sm:$0xff]
          %v820 = vld [vmem:[#allocation2 + $0x50] sm:$0xff]
          %v821 = vld [vmem:[#allocation2 + $0x58] sm:$0xff]
          %v822 = vld [vmem:[#allocation2 + $0x60] sm:$0xff]
          %v823 = vld [vmem:[#allocation2 + $0x68] sm:$0xff]
          %v824 = vld [vmem:[#allocation2 + $0x70] sm:$0xff]
          %v825 = vld [vmem:[#allocation2 + $0x78] sm:$0xff]
          %v826 = vld [vmem:[#allocation2 + $0x80] sm:$0xff]
          %v827 = vld [vmem:[#allocation2 + $0x88] sm:$0xff]
          %v828 = vld [vmem:[#allocation2 + $0x90] sm:$0xff]
          %v829 = vld [vmem:[#allocation2 + $0x98] sm:$0xff]
          %v830 = vld [vmem:[#allocation2 + $0xa0] sm:$0xff]
          %v831 = vld [vmem:[#allocation2 + $0xa8] sm:$0xff]
          %v832 = vld [vmem:[#allocation2 + $0xb0] sm:$0xff]
          %v833 = vld [vmem:[#allocation2 + $0xb8] sm:$0xff]
          %v834 = vld [vmem:[#allocation2 + $0xc0] sm:$0xff]
          %v835 = vld [vmem:[#allocation2 + $0xc8] sm:$0xff]
          %v836 = vld [vmem:[#allocation2 + $0xd0] sm:$0xff]
          %v837 = vld [vmem:[#allocation2 + $0xd8] sm:$0xff]
          %v838 = vld [vmem:[#allocation2 + $0xe0] sm:$0xff]
          %v839 = vld [vmem:[#allocation2 + $0xe8] sm:$0xff]
          %v840 = vld [vmem:[#allocation2 + $0xf0] sm:$0xff]
          %v841 = vld [vmem:[#allocation2 + $0xf8] sm:$0xff]
          %v842 = vld [vmem:[%s327] sm:$0xff]
          %v843 = vld [vmem:[%s327 + $0x8] sm:$0xff]
          %v844 = vld [vmem:[%s327 + $0x10] sm:$0xff]
          %v845 = vld [vmem:[%s327 + $0x18] sm:$0xff]
          %v846 = vld [vmem:[%s327 + $0x20] sm:$0xff]
          %v847 = vld [vmem:[%s327 + $0x28] sm:$0xff]
          %v848 = vld [vmem:[%s327 + $0x30] sm:$0xff]
          %v849 = vld [vmem:[%s327 + $0x38] sm:$0xff]
          %v850 = vld [vmem:[%s327 + $0x40] sm:$0xff]
          %v851 = vld [vmem:[%s327 + $0x48] sm:$0xff]
          %v852 = vld [vmem:[%s327 + $0x50] sm:$0xff]
          %v853 = vld [vmem:[%s327 + $0x58] sm:$0xff]
          %v854 = vld [vmem:[%s327 + $0x60] sm:$0xff]
          %v855 = vld [vmem:[%s327 + $0x68] sm:$0xff]
          %v856 = vld [vmem:[%s327 + $0x70] sm:$0xff]
          %v857 = vld [vmem:[%s327 + $0x78] sm:$0xff]
          %v858 = vld [vmem:[%s327 + $0x80] sm:$0xff]
          %v859 = vld [vmem:[%s327 + $0x88] sm:$0xff]
          %v860 = vld [vmem:[%s327 + $0x90] sm:$0xff]
          %v861 = vld [vmem:[%s327 + $0x98] sm:$0xff]
          %v862 = vld [vmem:[%s327 + $0xa0] sm:$0xff]
          %v863 = vld [vmem:[%s327 + $0xa8] sm:$0xff]
          %v864 = vld [vmem:[%s327 + $0xb0] sm:$0xff]
          %v865 = vld [vmem:[%s327 + $0xb8] sm:$0xff]
          %v866 = vld [vmem:[%s327 + $0xc0] sm:$0xff]
          %v867 = vld [vmem:[%s327 + $0xc8] sm:$0xff]
          %v868 = vld [vmem:[%s327 + $0xd0] sm:$0xff]
          %v869 = vld [vmem:[%s327 + $0xd8] sm:$0xff]
          %v870 = vld [vmem:[%s327 + $0xe0] sm:$0xff]
          %v871 = vld [vmem:[%s327 + $0xe8] sm:$0xff]
          %v872 = vld [vmem:[%s327 + $0xf0] sm:$0xff]
          %v873 = vld [vmem:[%s327 + $0xf8] sm:$0xff]
          %875 = vset.pattern.permute.xlu0 0
          %876 = vperm.xlu0 %875, %v842
          %v877 = vpop.permute.xlu0 %876
          %880 = vset.pattern.permute.xlu0 0
          %881 = vperm.xlu0 %880, %v843
          %v882 = vpop.permute.xlu0 %881
          %885 = vset.pattern.permute.xlu0 0
          %886 = vperm.xlu0 %885, %v844
          %v887 = vpop.permute.xlu0 %886
          %890 = vset.pattern.permute.xlu0 0
          %891 = vperm.xlu0 %890, %v845
          %v892 = vpop.permute.xlu0 %891
          %895 = vset.pattern.permute.xlu0 0
          %896 = vperm.xlu0 %895, %v846
          %v897 = vpop.permute.xlu0 %896
          %900 = vset.pattern.permute.xlu0 0
          %901 = vperm.xlu0 %900, %v847
          %v902 = vpop.permute.xlu0 %901
          %905 = vset.pattern.permute.xlu0 0
          %906 = vperm.xlu0 %905, %v848
          %v907 = vpop.permute.xlu0 %906
          %910 = vset.pattern.permute.xlu0 0
          %911 = vperm.xlu0 %910, %v849
          %v912 = vpop.permute.xlu0 %911
          %915 = vset.pattern.permute.xlu0 0
          %916 = vperm.xlu0 %915, %v850
          %v917 = vpop.permute.xlu0 %916
          %920 = vset.pattern.permute.xlu0 0
          %921 = vperm.xlu0 %920, %v851
          %v922 = vpop.permute.xlu0 %921
          %925 = vset.pattern.permute.xlu0 0
          %926 = vperm.xlu0 %925, %v852
          %v927 = vpop.permute.xlu0 %926
          %930 = vset.pattern.permute.xlu0 0
          %931 = vperm.xlu0 %930, %v853
          %v932 = vpop.permute.xlu0 %931
          %935 = vset.pattern.permute.xlu0 0
          %936 = vperm.xlu0 %935, %v854
          %v937 = vpop.permute.xlu0 %936
          %940 = vset.pattern.permute.xlu0 0
          %941 = vperm.xlu0 %940, %v855
          %v942 = vpop.permute.xlu0 %941
          %945 = vset.pattern.permute.xlu0 0
          %946 = vperm.xlu0 %945, %v856
          %v947 = vpop.permute.xlu0 %946
          %950 = vset.pattern.permute.xlu0 0
          %951 = vperm.xlu0 %950, %v857
          %v952 = vpop.permute.xlu0 %951
          %955 = vset.pattern.permute.xlu0 0
          %956 = vperm.xlu0 %955, %v858
          %v957 = vpop.permute.xlu0 %956
          %960 = vset.pattern.permute.xlu0 0
          %961 = vperm.xlu0 %960, %v859
          %v962 = vpop.permute.xlu0 %961
          %965 = vset.pattern.permute.xlu0 0
          %966 = vperm.xlu0 %965, %v860
          %v967 = vpop.permute.xlu0 %966
          %970 = vset.pattern.permute.xlu0 0
          %971 = vperm.xlu0 %970, %v861
          %v972 = vpop.permute.xlu0 %971
          %975 = vset.pattern.permute.xlu0 0
          %976 = vperm.xlu0 %975, %v862
          %v977 = vpop.permute.xlu0 %976
          %980 = vset.pattern.permute.xlu0 0
          %981 = vperm.xlu0 %980, %v863
          %v982 = vpop.permute.xlu0 %981
          %985 = vset.pattern.permute.xlu0 0
          %986 = vperm.xlu0 %985, %v864
          %v987 = vpop.permute.xlu0 %986
          %990 = vset.pattern.permute.xlu0 0
          %991 = vperm.xlu0 %990, %v865
          %v992 = vpop.permute.xlu0 %991
          %995 = vset.pattern.permute.xlu0 0
          %996 = vperm.xlu0 %995, %v866
          %v997 = vpop.permute.xlu0 %996
          %1000 = vset.pattern.permute.xlu0 0
          %1001 = vperm.xlu0 %1000, %v867
          %v1002 = vpop.permute.xlu0 %1001
          %1005 = vset.pattern.permute.xlu0 0
          %1006 = vperm.xlu0 %1005, %v868
          %v1007 = vpop.permute.xlu0 %1006
          %1010 = vset.pattern.permute.xlu0 0
          %1011 = vperm.xlu0 %1010, %v869
          %v1012 = vpop.permute.xlu0 %1011
          %1015 = vset.pattern.permute.xlu0 0
          %1016 = vperm.xlu0 %1015, %v870
          %v1017 = vpop.permute.xlu0 %1016
          %1020 = vset.pattern.permute.xlu0 0
          %1021 = vperm.xlu0 %1020, %v871
          %v1022 = vpop.permute.xlu0 %1021
          %1025 = vset.pattern.permute.xlu0 0
          %1026 = vperm.xlu0 %1025, %v872
          %v1027 = vpop.permute.xlu0 %1026
          %1030 = vset.pattern.permute.xlu0 0
          %1031 = vperm.xlu0 %1030, %v873
          %v1032 = vpop.permute.xlu0 %1031
          %v1034 = vmul.f32 %v810, %v877
          %v1035 = vmul.f32 %v811, %v882
          %v1036 = vmul.f32 %v812, %v887
          %v1037 = vmul.f32 %v813, %v892
          %v1038 = vmul.f32 %v814, %v897
          %v1039 = vmul.f32 %v815, %v902
          %v1040 = vmul.f32 %v816, %v907
          %v1041 = vmul.f32 %v817, %v912
          %v1042 = vmul.f32 %v818, %v917
          %v1043 = vmul.f32 %v819, %v922
          %v1044 = vmul.f32 %v820, %v927
          %v1045 = vmul.f32 %v821, %v932
          %v1046 = vmul.f32 %v822, %v937
          %v1047 = vmul.f32 %v823, %v942
          %v1048 = vmul.f32 %v824, %v947
          %v1049 = vmul.f32 %v825, %v952
          %v1050 = vmul.f32 %v826, %v957
          %v1051 = vmul.f32 %v827, %v962
          %v1052 = vmul.f32 %v828, %v967
          %v1053 = vmul.f32 %v829, %v972
          %v1054 = vmul.f32 %v830, %v977
          %v1055 = vmul.f32 %v831, %v982
          %v1056 = vmul.f32 %v832, %v987
          %v1057 = vmul.f32 %v833, %v992
          %v1058 = vmul.f32 %v834, %v997
          %v1059 = vmul.f32 %v835, %v1002
          %v1060 = vmul.f32 %v836, %v1007
          %v1061 = vmul.f32 %v837, %v1012
          %v1062 = vmul.f32 %v838, %v1017
          %v1063 = vmul.f32 %v839, %v1022
          %v1064 = vmul.f32 %v840, %v1027
          %v1065 = vmul.f32 %v841, %v1032
          %v1066 = vpack.c.bf16 %v1035, %v1034
          %v1067 = vpack.c.bf16 %v1037, %v1036
          %v1068 = vpack.c.bf16 %v1039, %v1038
          %v1069 = vpack.c.bf16 %v1041, %v1040
          %v1070 = vpack.c.bf16 %v1043, %v1042
          %v1071 = vpack.c.bf16 %v1045, %v1044
          %v1072 = vpack.c.bf16 %v1047, %v1046
          %v1073 = vpack.c.bf16 %v1049, %v1048
          %v1074 = vpack.c.bf16 %v1051, %v1050
          %v1075 = vpack.c.bf16 %v1053, %v1052
          %v1076 = vpack.c.bf16 %v1055, %v1054
          %v1077 = vpack.c.bf16 %v1057, %v1056
          %v1078 = vpack.c.bf16 %v1059, %v1058
          %v1079 = vpack.c.bf16 %v1061, %v1060
          %v1080 = vpack.c.bf16 %v1063, %v1062
          %v1081 = vpack.c.bf16 %v1065, %v1064
          %v1098 = vunpack.c.l.b16 %v1066
          %v1099 = vunpack.c.h.b16 %v1066
          %v1100 = vunpack.c.l.b16 %v1067
          %v1101 = vunpack.c.h.b16 %v1067
          %v1102 = vunpack.c.l.b16 %v1068
          %v1103 = vunpack.c.h.b16 %v1068
          %v1104 = vunpack.c.l.b16 %v1069
          %v1105 = vunpack.c.h.b16 %v1069
          %v1106 = vunpack.c.l.b16 %v1070
          %v1107 = vunpack.c.h.b16 %v1070
          %v1108 = vunpack.c.l.b16 %v1071
          %v1109 = vunpack.c.h.b16 %v1071
          %v1110 = vunpack.c.l.b16 %v1072
          %v1111 = vunpack.c.h.b16 %v1072
          %v1112 = vunpack.c.l.b16 %v1073
          %v1113 = vunpack.c.h.b16 %v1073
          %v1114 = vunpack.c.l.b16 %v1074
          %v1115 = vunpack.c.h.b16 %v1074
          %v1116 = vunpack.c.l.b16 %v1075
          %v1117 = vunpack.c.h.b16 %v1075
          %v1118 = vunpack.c.l.b16 %v1076
          %v1119 = vunpack.c.h.b16 %v1076
          %v1120 = vunpack.c.l.b16 %v1077
          %v1121 = vunpack.c.h.b16 %v1077
          %v1122 = vunpack.c.l.b16 %v1078
          %v1123 = vunpack.c.h.b16 %v1078
          %v1124 = vunpack.c.l.b16 %v1079
          %v1125 = vunpack.c.h.b16 %v1079
          %v1126 = vunpack.c.l.b16 %v1080
          %v1127 = vunpack.c.h.b16 %v1080
          %v1128 = vunpack.c.l.b16 %v1081
          %v1129 = vunpack.c.h.b16 %v1081
          %v1130 = vpack.c.b16 %v1098, %v1098
          %v1131 = vpack.c.b16 %v1099, %v1099
          %v1132 = vpack.c.b16 %v1100, %v1100
          %v1133 = vpack.c.b16 %v1101, %v1101
          %v1134 = vpack.c.b16 %v1102, %v1102
          %v1135 = vpack.c.b16 %v1103, %v1103
          %v1136 = vpack.c.b16 %v1104, %v1104
          %v1137 = vpack.c.b16 %v1105, %v1105
          %v1138 = vpack.c.b16 %v1106, %v1106
          %v1139 = vpack.c.b16 %v1107, %v1107
          %v1140 = vpack.c.b16 %v1108, %v1108
          %v1141 = vpack.c.b16 %v1109, %v1109
          %v1142 = vpack.c.b16 %v1110, %v1110
          %v1143 = vpack.c.b16 %v1111, %v1111
          %v1144 = vpack.c.b16 %v1112, %v1112
          %v1145 = vpack.c.b16 %v1113, %v1113
          %v1146 = vpack.c.b16 %v1114, %v1114
          %v1147 = vpack.c.b16 %v1115, %v1115
          %v1148 = vpack.c.b16 %v1116, %v1116
          %v1149 = vpack.c.b16 %v1117, %v1117
          %v1150 = vpack.c.b16 %v1118, %v1118
          %v1151 = vpack.c.b16 %v1119, %v1119
          %v1152 = vpack.c.b16 %v1120, %v1120
          %v1153 = vpack.c.b16 %v1121, %v1121
          %v1154 = vpack.c.b16 %v1122, %v1122
          %v1155 = vpack.c.b16 %v1123, %v1123
          %v1156 = vpack.c.b16 %v1124, %v1124
          %v1157 = vpack.c.b16 %v1125, %v1125
          %v1158 = vpack.c.b16 %v1126, %v1126
          %v1159 = vpack.c.b16 %v1127, %v1127
          %v1160 = vpack.c.b16 %v1128, %v1128
          %v1161 = vpack.c.b16 %v1129, %v1129
          %1194 = vst [vmem:[%s303] sm:$0xf] %v1130
          %1195 = vst [vmem:[%s303 + $0x4] sm:$0xf] %v1131
          %1196 = vst [vmem:[%s303 + $0x8] sm:$0xf] %v1132
          %1197 = vst [vmem:[%s303 + $0xc] sm:$0xf] %v1133
          %1198 = vst [vmem:[%s303 + $0x10] sm:$0xf] %v1134
          %1199 = vst [vmem:[%s303 + $0x14] sm:$0xf] %v1135
          %1200 = vst [vmem:[%s303 + $0x18] sm:$0xf] %v1136
          %1201 = vst [vmem:[%s303 + $0x1c] sm:$0xf] %v1137
          %1202 = vst [vmem:[%s303 + $0x20] sm:$0xf] %v1138
          %1203 = vst [vmem:[%s303 + $0x24] sm:$0xf] %v1139
          %1204 = vst [vmem:[%s303 + $0x28] sm:$0xf] %v1140
          %1205 = vst [vmem:[%s303 + $0x2c] sm:$0xf] %v1141
          %1206 = vst [vmem:[%s303 + $0x30] sm:$0xf] %v1142
          %1207 = vst [vmem:[%s303 + $0x34] sm:$0xf] %v1143
          %1208 = vst [vmem:[%s303 + $0x38] sm:$0xf] %v1144
          %1209 = vst [vmem:[%s303 + $0x3c] sm:$0xf] %v1145
          %1210 = vst [vmem:[%s303 + $0x40] sm:$0xf] %v1146
          %1211 = vst [vmem:[%s303 + $0x44] sm:$0xf] %v1147
          %1212 = vst [vmem:[%s303 + $0x48] sm:$0xf] %v1148
          %1213 = vst [vmem:[%s303 + $0x4c] sm:$0xf] %v1149
          %1214 = vst [vmem:[%s303 + $0x50] sm:$0xf] %v1150
          %1215 = vst [vmem:[%s303 + $0x54] sm:$0xf] %v1151
          %1216 = vst [vmem:[%s303 + $0x58] sm:$0xf] %v1152
          %1217 = vst [vmem:[%s303 + $0x5c] sm:$0xf] %v1153
          %1218 = vst [vmem:[%s303 + $0x60] sm:$0xf] %v1154
          %1219 = vst [vmem:[%s303 + $0x64] sm:$0xf] %v1155
          %1220 = vst [vmem:[%s303 + $0x68] sm:$0xf] %v1156
          %1221 = vst [vmem:[%s303 + $0x6c] sm:$0xf] %v1157
          %1222 = vst [vmem:[%s303 + $0x70] sm:$0xf] %v1158
          %1223 = vst [vmem:[%s303 + $0x74] sm:$0xf] %v1159
          %1224 = vst [vmem:[%s303 + $0x78] sm:$0xf] %v1160
          %1225 = vst [vmem:[%s303 + $0x7c] sm:$0xf] %v1161
          %v1226 = vld [vmem:[%s264] sm:$0xff]
          %v1227 = vld [vmem:[%s264 + $0x8] sm:$0xff]
          %v1228 = vld [vmem:[%s264 + $0x10] sm:$0xff]
          %v1229 = vld [vmem:[%s264 + $0x18] sm:$0xff]
          %v1230 = vld [vmem:[%s264 + $0x20] sm:$0xff]
          %v1231 = vld [vmem:[%s264 + $0x28] sm:$0xff]
          %v1232 = vld [vmem:[%s264 + $0x30] sm:$0xff]
          %v1233 = vld [vmem:[%s264 + $0x38] sm:$0xff]
          %v1234 = vld [vmem:[%s264 + $0x40] sm:$0xff]
          %v1235 = vld [vmem:[%s264 + $0x48] sm:$0xff]
          %v1236 = vld [vmem:[%s264 + $0x50] sm:$0xff]
          %v1237 = vld [vmem:[%s264 + $0x58] sm:$0xff]
          %v1238 = vld [vmem:[%s264 + $0x60] sm:$0xff]
          %v1239 = vld [vmem:[%s264 + $0x68] sm:$0xff]
          %v1240 = vld [vmem:[%s264 + $0x70] sm:$0xff]
          %v1241 = vld [vmem:[%s264 + $0x78] sm:$0xff]
          %v1242 = vld [vmem:[%s264 + $0x80] sm:$0xff]
          %v1243 = vld [vmem:[%s264 + $0x88] sm:$0xff]
          %v1244 = vld [vmem:[%s264 + $0x90] sm:$0xff]
          %v1245 = vld [vmem:[%s264 + $0x98] sm:$0xff]
          %v1246 = vld [vmem:[%s264 + $0xa0] sm:$0xff]
          %v1247 = vld [vmem:[%s264 + $0xa8] sm:$0xff]
          %v1248 = vld [vmem:[%s264 + $0xb0] sm:$0xff]
          %v1249 = vld [vmem:[%s264 + $0xb8] sm:$0xff]
          %v1250 = vld [vmem:[%s264 + $0xc0] sm:$0xff]
          %v1251 = vld [vmem:[%s264 + $0xc8] sm:$0xff]
          %v1252 = vld [vmem:[%s264 + $0xd0] sm:$0xff]
          %v1253 = vld [vmem:[%s264 + $0xd8] sm:$0xff]
          %v1254 = vld [vmem:[%s264 + $0xe0] sm:$0xff]
          %v1255 = vld [vmem:[%s264 + $0xe8] sm:$0xff]
          %v1256 = vld [vmem:[%s264 + $0xf0] sm:$0xff]
          %v1257 = vld [vmem:[%s264 + $0xf8] sm:$0xff]
          %v1258 = vmul.f32 %v1034, 0.33333334
          %v1259 = vmul.f32 %v1035, 0.33333334
          %v1260 = vmul.f32 %v1036, 0.33333334
          %v1261 = vmul.f32 %v1037, 0.33333334
          %v1262 = vmul.f32 %v1038, 0.33333334
          %v1263 = vmul.f32 %v1039, 0.33333334
          %v1264 = vmul.f32 %v1040, 0.33333334
          %v1265 = vmul.f32 %v1041, 0.33333334
          %v1266 = vmul.f32 %v1042, 0.33333334
          %v1267 = vmul.f32 %v1043, 0.33333334
          %v1268 = vmul.f32 %v1044, 0.33333334
          %v1269 = vmul.f32 %v1045, 0.33333334
          %v1270 = vmul.f32 %v1046, 0.33333334
          %v1271 = vmul.f32 %v1047, 0.33333334
          %v1272 = vmul.f32 %v1048, 0.33333334
          %v1273 = vmul.f32 %v1049, 0.33333334
          %v1274 = vmul.f32 %v1050, 0.33333334
          %v1275 = vmul.f32 %v1051, 0.33333334
          %v1276 = vmul.f32 %v1052, 0.33333334
          %v1277 = vmul.f32 %v1053, 0.33333334
          %v1278 = vmul.f32 %v1054, 0.33333334
          %v1279 = vmul.f32 %v1055, 0.33333334
          %v1280 = vmul.f32 %v1056, 0.33333334
          %v1281 = vmul.f32 %v1057, 0.33333334
          %v1282 = vmul.f32 %v1058, 0.33333334
          %v1283 = vmul.f32 %v1059, 0.33333334
          %v1284 = vmul.f32 %v1060, 0.33333334
          %v1285 = vmul.f32 %v1061, 0.33333334
          %v1286 = vmul.f32 %v1062, 0.33333334
          %v1287 = vmul.f32 %v1063, 0.33333334
          %v1288 = vmul.f32 %v1064, 0.33333334
          %v1289 = vmul.f32 %v1065, 0.33333334
          %v1290 = vadd.f32 %v1226, %v1258
          %v1291 = vadd.f32 %v1227, %v1259
          %v1292 = vadd.f32 %v1228, %v1260
          %v1293 = vadd.f32 %v1229, %v1261
          %v1294 = vadd.f32 %v1230, %v1262
          %v1295 = vadd.f32 %v1231, %v1263
          %v1296 = vadd.f32 %v1232, %v1264
          %v1297 = vadd.f32 %v1233, %v1265
          %v1298 = vadd.f32 %v1234, %v1266
          %v1299 = vadd.f32 %v1235, %v1267
          %v1300 = vadd.f32 %v1236, %v1268
          %v1301 = vadd.f32 %v1237, %v1269
          %v1302 = vadd.f32 %v1238, %v1270
          %v1303 = vadd.f32 %v1239, %v1271
          %v1304 = vadd.f32 %v1240, %v1272
          %v1305 = vadd.f32 %v1241, %v1273
          %v1306 = vadd.f32 %v1242, %v1274
          %v1307 = vadd.f32 %v1243, %v1275
          %v1308 = vadd.f32 %v1244, %v1276
          %v1309 = vadd.f32 %v1245, %v1277
          %v1310 = vadd.f32 %v1246, %v1278
          %v1311 = vadd.f32 %v1247, %v1279
          %v1312 = vadd.f32 %v1248, %v1280
          %v1313 = vadd.f32 %v1249, %v1281
          %v1314 = vadd.f32 %v1250, %v1282
          %v1315 = vadd.f32 %v1251, %v1283
          %v1316 = vadd.f32 %v1252, %v1284
          %v1317 = vadd.f32 %v1253, %v1285
          %v1318 = vadd.f32 %v1254, %v1286
          %v1319 = vadd.f32 %v1255, %v1287
          %v1320 = vadd.f32 %v1256, %v1288
          %v1321 = vadd.f32 %v1257, %v1289
          %1322 = vst [vmem:[%s310] sm:$0xff] %v1290
          %1323 = vst [vmem:[%s310 + $0x8] sm:$0xff] %v1291
          %1324 = vst [vmem:[%s310 + $0x10] sm:$0xff] %v1292
          %1325 = vst [vmem:[%s310 + $0x18] sm:$0xff] %v1293
          %1326 = vst [vmem:[%s310 + $0x20] sm:$0xff] %v1294
          %1327 = vst [vmem:[%s310 + $0x28] sm:$0xff] %v1295
          %1328 = vst [vmem:[%s310 + $0x30] sm:$0xff] %v1296
          %1329 = vst [vmem:[%s310 + $0x38] sm:$0xff] %v1297
          %1330 = vst [vmem:[%s310 + $0x40] sm:$0xff] %v1298
          %1331 = vst [vmem:[%s310 + $0x48] sm:$0xff] %v1299
          %1332 = vst [vmem:[%s310 + $0x50] sm:$0xff] %v1300
          %1333 = vst [vmem:[%s310 + $0x58] sm:$0xff] %v1301
          %1334 = vst [vmem:[%s310 + $0x60] sm:$0xff] %v1302
          %1335 = vst [vmem:[%s310 + $0x68] sm:$0xff] %v1303
          %1336 = vst [vmem:[%s310 + $0x70] sm:$0xff] %v1304
          %1337 = vst [vmem:[%s310 + $0x78] sm:$0xff] %v1305
          %1338 = vst [vmem:[%s310 + $0x80] sm:$0xff] %v1306
          %1339 = vst [vmem:[%s310 + $0x88] sm:$0xff] %v1307
          %1340 = vst [vmem:[%s310 + $0x90] sm:$0xff] %v1308
          %1341 = vst [vmem:[%s310 + $0x98] sm:$0xff] %v1309
          %1342 = vst [vmem:[%s310 + $0xa0] sm:$0xff] %v1310
          %1343 = vst [vmem:[%s310 + $0xa8] sm:$0xff] %v1311
          %1344 = vst [vmem:[%s310 + $0xb0] sm:$0xff] %v1312
          %1345 = vst [vmem:[%s310 + $0xb8] sm:$0xff] %v1313
          %1346 = vst [vmem:[%s310 + $0xc0] sm:$0xff] %v1314
          %1347 = vst [vmem:[%s310 + $0xc8] sm:$0xff] %v1315
          %1348 = vst [vmem:[%s310 + $0xd0] sm:$0xff] %v1316
          %1349 = vst [vmem:[%s310 + $0xd8] sm:$0xff] %v1317
          %1350 = vst [vmem:[%s310 + $0xe0] sm:$0xff] %v1318
          %1351 = vst [vmem:[%s310 + $0xe8] sm:$0xff] %v1319
          %1352 = vst [vmem:[%s310 + $0xf0] sm:$0xff] %v1320
          %1353 = vst [vmem:[%s310 + $0xf8] sm:$0xff] %v1321
        $region48: #{tpu_custom_call.1} parent=35 // pred_fallthru
          _
        %s1354 = sand.u32 %s147, 1
        %s1355 = scalar_lea.sflag [#allocation5], %s1354
        %s1356 = sand.u32 %s147, 1
        %s1357 = smul.addr %s1356, 128
        %s1358 = scalar_lea.vmem [#allocation6], %s1357
        %s1359 = sand.u32 %s173, 1
        %s1360 = scalar_lea.sflag [#allocation8], %s1359
        %s1361 = sand.u32 %s173, 1
        %s1362 = smul.addr %s1361, 256
        %s1363 = scalar_lea.vmem [#allocation7], %s1362
        // Predicated region
        $region49: #{tpu_custom_call.1} parent=35 // pred_check
          %p1364 = pneg %p157
        $region50: #{tpu_custom_call.1} parent=35 // pred_check_branch
          %1366 = sbr.rel (%p1364) target = $region52
        $region51: #{tpu_custom_call.1} parent=35 // pred_region
          %s1367 = smul.u32 32, %s30
          %s1369 = ssub.s32 2048, 2048
          %1370 = vsyncadd %s1355, %s1369
          %s1371 = smul.addr %s1367, 64
          %s1372 = scalar_lea.hbm %s4, %s1371
          %s1373 = sshll.u32 %s1358, 4
          %s1374 = int_to_ptr.vmem [resolvable:$true] %s1373
          %1379 = dma.vmem_to_hbm [thread:$0]  %s1374, 2048, %s1372, %s1355, 64, 64, 4
        $region52: #{tpu_custom_call.1} parent=35 // pred_fallthru
          _
        // Predicated region
        $region53: #{tpu_custom_call.1} parent=35 // pred_check
          %p1380 = pneg %p183
        $region54: #{tpu_custom_call.1} parent=35 // pred_check_branch
          %1382 = sbr.rel (%p1380) target = $region56
        $region55: #{tpu_custom_call.1} parent=35 // pred_region
          %s1383 = smul.u32 32, %s30
          %s1385 = ssub.s32 4096, 4096
          %1386 = vsyncadd %s1360, %s1385
          %s1387 = smul.addr %s1383, 128
          %s1388 = scalar_lea.hbm %s5, %s1387
          %s1389 = sshll.u32 %s1363, 4
          %s1390 = int_to_ptr.vmem [resolvable:$true] %s1389
          %1395 = dma.vmem_to_hbm [thread:$0]  %s1390, 4096, %s1388, %s1360, 128, 128, 8
        $region56: #{tpu_custom_call.1} parent=35 // pred_fallthru
          _
      $region36: #{tpu_custom_call.1} parent=5 // pred_fallthru
        _
      %p1396 = scmp.le.s32.totalorder 2, %s21
      // Predicated region
      $region57: #{tpu_custom_call.1} parent=5 // pred_check
        %p1397 = pneg %p1396
      $region58: #{tpu_custom_call.1} parent=5 // pred_check_branch
        %1399 = sbr.rel (%p1397) target = $region60
      $region59: #{tpu_custom_call.1} parent=5 // pred_region
        %s1400 = ssub.s32 %s21, 2
        // Predicated region
        $region61: #{tpu_custom_call.1} parent=59 // pred_check
          %p1401 = pneg %p163
        $region62: #{tpu_custom_call.1} parent=59 // pred_check_branch
          %1403 = sbr.rel (%p1401) target = $region64
        $region63: #{tpu_custom_call.1} parent=59 // pred_region
          %s1404 = sand.u32 %s148, 1
          %s1405 = scalar_lea.sflag [#allocation5], %s1404
          %s1406 = sand.u32 %s148, 1
          %s1407 = smul.addr %s1406, 128
          %s1408 = scalar_lea.vmem [#allocation6], %s1407
          %1409 = dma.done %s1405, 2048
        $region64: #{tpu_custom_call.1} parent=59 // pred_fallthru
          _
        // Predicated region
        $region65: #{tpu_custom_call.1} parent=59 // pred_check
          %p1410 = pneg %p189
        $region66: #{tpu_custom_call.1} parent=59 // pred_check_branch
          %1412 = sbr.rel (%p1410) target = $region68
        $region67: #{tpu_custom_call.1} parent=59 // pred_region
          %s1413 = sand.u32 %s174, 1
          %s1414 = scalar_lea.sflag [#allocation8], %s1413
          %s1415 = sand.u32 %s174, 1
          %s1416 = smul.addr %s1415, 256
          %s1417 = scalar_lea.vmem [#allocation7], %s1416
          %1418 = dma.done %s1414, 4096
        $region68: #{tpu_custom_call.1} parent=59 // pred_fallthru
          _
      $region60: #{tpu_custom_call.1} parent=5 // pred_fallthru
        _
    $region6: #{tpu_custom_call.1} parent=1 // loop_footer
      %s25 = sadd.s32 1, %s21
    $region7: #{tpu_custom_call.1} parent=1 // loop_footer_branch
      %20 = sbr.rel target = $region3
    $region8: #{tpu_custom_call.1} parent=1 // loop_exit
      _
    %1419 = vsyncpa [#allocation4], 1
    %s1420 = scalar_lea.sflag [#allocation4], 1
    %1421 = vsyncpa %s1420, 1
    %1422 = vsyncpa [#allocation5], 1
    %s1423 = scalar_lea.sflag [#allocation5], 1
    %1424 = vsyncpa %s1423, 1
    %1425 = vsyncpa [#allocation8], 1
    %s1426 = scalar_lea.sflag [#allocation8], 1
    %1427 = vsyncpa %s1426, 1

</llo_original>
